<compile_context>
chip_gen: v7x
topology: tpu7x:2x2x1
jax: 0.10.0
libtpu: 0.0.40
codegen_flags: <defaults>
</compile_context>

<pallas_src>
import functools

import numpy as np

import jax
import jax.numpy as jnp
from jax import lax
from jax.experimental import pallas as pl
from jax.experimental.pallas import tpu as pltpu

# ----------------------------- static config --------------------------------
MAP_H, MAP_W = 16, 32          # small map_size for the example
N_ACTIONS = 8
ACTION_HORIZON = 8
DS_MAP = 1                     # reward_cfg['ds']
TEMPERATURE = 1.0              # policy_kwargs['temperature']
POLICY_SHARPEN = "sharpen"     # policy_kwargs['method']
ZERO_TERMINAL_STATE = True

# register_buffer('dynamics', ...)
DYNAMICS = jnp.array(
    [[-1, -1], [-1, 0], [-1, 1], [0, -1], [0, 1], [1, -1], [1, 0], [1, 1]],
    dtype=jnp.int32,
)


def make_transition_probs():
    """Replicates the 'pp' branch of MaxEntIRL.__init__ exactly."""
    tp = np.zeros((N_ACTIONS, 1, 3, 3), np.float32)
    left = [[1, 2], [2, 2], [2, 1], [0, 2], [2, 0], [0, 1], [0, 0], [1, 0]]
    center = [[2, 2], [2, 1], [2, 0], [1, 2], [1, 0], [0, 2], [0, 1], [0, 0]]
    right = [[2, 1], [2, 0], [1, 0], [2, 2], [0, 0], [1, 2], [0, 2], [0, 1]]
    for i in range(N_ACTIONS):
        tp[i, 0, left[i][0], left[i][1]] = 0.0
        tp[i, 0, center[i][0], center[i][1]] = 1.0
        tp[i, 0, right[i][0], right[i][1]] = 0.0
    return jnp.asarray(tp)


def make_fov_mask(H, W):
    # TODO(synk): tu.create_trapezoidal_fov_mask is an external util; a simple
    # trapezoidal mask with the same shape/role is synthesized here.
    rows = jnp.arange(H)[:, None].astype(jnp.float32)
    cols = jnp.arange(W)[None, :].astype(jnp.float32)
    center = (W - 1) / 2.0
    half_w = (W // 4) + rows * ((W / 2.0 - W // 4) / max(H - 1, 1))
    return jnp.abs(cols - center) <= half_w  # (H, W) bool


# ------------------- trace-time specialization of the 3x3 conv ---------------
def build_tap_tables(transition_probs, H, W):
    """Specialize the grouped 3x3 conv at trace time.

    transition_probs is a CONSTANT construction-time buffer (one-hot per
    action here), so only its NONZERO taps are unrolled.  Returns static
    (action, lane-shift) tables and a (1, n_taps, H*W) float32 array that
    folds, per tap, the conv weight and the zero-padding boundary mask (valid
    *source* cells).  NOTE: this specializes at trace time; if
    transition_probs ever becomes traced/learned this must move in-kernel.
    """
    tp = np.asarray(jax.device_get(transition_probs), np.float32)
    A = tp.shape[0]
    tp = tp.reshape(A, 3, 3)
    HW = H * W
    ri = np.arange(HW, dtype=np.int64) // W
    ci = np.arange(HW, dtype=np.int64) % W
    actions, shifts, masks = [], [], []
    for a in range(A):
        for dy in range(3):
            for dx in range(3):
                w = float(tp[a, dy, dx])
                if w == 0.0:
                    continue
                sy, sx = dy - 1, dx - 1
                # F.conv2d(padding=1) (cross-correlation):
                #   out[i, j] += w * in[i + sy, j + sx]
                # so source cell (i, j) sends mass to (i - sy, j - sx); only
                # sources whose target stays on the map contribute (the conv's
                # implicit zero padding).  This also kills flat-roll row wrap.
                valid = ((ri - sy >= 0) & (ri - sy < H)
                         & (ci - sx >= 0) & (ci - sx < W))
                actions.append(a)
                shifts.append(int((-(sy * W + sx)) % HW))   # np.roll convention
                masks.append(valid.astype(np.float32) * w)
    if not masks:   # degenerate all-zero conv: one dummy zero tap
        actions, shifts = [0], [0]
        masks = [np.zeros((HW,), np.float32)]
    mask_arr = np.stack(masks, axis=0)[None]                 # (1, n_taps, HW)
    return tuple(actions), tuple(shifts), jnp.asarray(mask_arr)


# ------------------------------ fused Pallas kernel ---------------------------
def _fused_esvf_kernel(s0_ref, s1_ref, masks_ref, policy_ref, svf_ref, *,
                       tap_actions, tap_shifts, horizon, inv_temperature,
                       sharpen, zero_terminal):
    """Fused sharpen + SVF propagation + terminal masking + exp_svf reduction.

    s0_ref, s1_ref : (B, 1) int32     start / terminal flat state per batch
    masks_ref      : (1, n_taps, HW)  per-tap conv weight * boundary mask
    policy_ref     : (B, A, HW) f32   raw policy logits (NATURAL layout)
    svf_ref (out)  : (B, HW) f32      exp_svf = sum_t mu_t
    """
    n_taps = len(tap_actions)
    B, A, HW = policy_ref.shape

    # ---- 1) policy sharpening: softmax over the action (sublane) axis --------
    p = policy_ref[...]                                     # (B, A, HW)
    if sharpen:
        m = jnp.max(p, axis=1, keepdims=True)
        e = jnp.exp((p - m) * inv_temperature)
        denom = jnp.sum(e, axis=1, keepdims=True)
        sm = e / denom            # exact normalization (approx recip removed)
    else:
        sm = p

    # ---- 2) fold conv-tap weight + boundary mask with ONE slab multiply ------
    if tuple(tap_actions) == tuple(range(A)) and n_taps == A:
        pol = sm * masks_ref[...]                           # (B, A, HW)
    else:  # general tap table: gather the per-tap action slices first
        sm_taps = jnp.stack([sm[:, a, :] for a in tap_actions], axis=1)
        pol = sm_taps * masks_ref[...]                      # (B, n_taps, HW)

    # ---- 3) initial visitation / terminal-state mask (lane-dense (B, HW)) ---
    idx = lax.broadcasted_iota(jnp.int32, (1, HW), 1)       # flat state index
    cur0 = (idx == s0_ref[...]).astype(jnp.float32)         # (B, HW) mu_0
    svf0 = jnp.zeros_like(cur0)
    keep_s1 = None
    if zero_terminal:
        keep_s1 = 1.0 - (idx == s1_ref[...]).astype(jnp.float32)   # (B, HW)

    # ---- 4) action-horizon propagation, cur/svf carried in vregs -------------
    def step(_t, carry):
        cur, svf = carry
        if zero_terminal:
            cur = cur * keep_s1                   # mu[:, t-1, S1] = 0
        svf = svf + cur                           # accumulate mu[:, t-1]
        pm_all = pol * cur[:, None, :]            # ONE fused slab multiply
        new = jnp.zeros_like(cur)
        for i in range(n_taps):
            pm = pm_all[:, i, :]
            shift = tap_shifts[i]
            if shift:
                pm = pltpu.roll(pm, shift, 1)     # XLU lane rotate (+-1 cell)
            new = new + pm
        return new, svf

    cur, svf = lax.fori_loop(1, horizon, step, (cur0, svf0), unroll=True)
    svf_ref[...] = svf + cur                      # + mu[:, horizon-1]; one store


def fused_expected_svf(policy, S0, S1, transition_probs, *, action_horizon,
                       temperature, sharpen_method, zero_terminal_state):
    """One pallas_call: sharpen + SVF horizon loop + terminal mask + sum."""
    if sharpen_method not in ("sharpen", "none"):
        raise ValueError(f"Policy method {sharpen_method} not found.")
    B, A, H, W = policy.shape
    HW = H * W

    tap_actions, tap_shifts, tap_masks = build_tap_tables(transition_probs, H, W)

    # NATURAL layout (B, A, HW): a free reshape, no host-side transpose pass.
    policy_flat = policy.reshape(B, A, HW)
    s0v = S0.astype(jnp.int32).reshape(B, 1)
    s1v = S1.astype(jnp.int32).reshape(B, 1)

    kernel = functools.partial(
        _fused_esvf_kernel,
        tap_actions=tap_actions,
        tap_shifts=tap_shifts,
        horizon=int(action_horizon),
        inv_temperature=float(1.0 / temperature),
        sharpen=(sharpen_method == "sharpen"),
        zero_terminal=bool(zero_terminal_state),
    )
    exp_svf = pl.pallas_call(
        kernel,
        out_shape=jax.ShapeDtypeStruct((B, HW), jnp.float32),
        in_specs=[
            pl.BlockSpec(memory_space=pltpu.MemorySpace.VMEM),  # S0 (B,1) i32
            pl.BlockSpec(memory_space=pltpu.MemorySpace.VMEM),  # S1 (B,1) i32
            pl.BlockSpec(memory_space=pltpu.MemorySpace.VMEM),  # tap masks
            pl.BlockSpec(memory_space=pltpu.MemorySpace.VMEM),  # policy slab
        ],
        out_specs=pl.BlockSpec(memory_space=pltpu.MemorySpace.VMEM),
    )(s0v, s1v, tap_masks, policy_flat)
    return exp_svf.reshape(B, H, W)


# ----------------------------- host-side glue --------------------------------
def expert_to_endpoints(expert, fov_mask, H, W, ds_map):
    """Expert poses -> (S0, S1) flat start/terminal states (plain JAX)."""
    B = expert.shape[0]
    S = (expert[:, :, :2, 2] // ds_map).astype(jnp.int32)
    S = S.at[:, :, 0].set(jnp.clip(S[:, :, 0], 0, H - 1))
    S = S.at[:, :, 1].set(jnp.clip(S[:, :, 1], 0, W - 1))
    # earliest pose inside the FOV  (TODO(synk): exact tu.earliest_pose_in_fov
    # semantics unavailable; first-in-fov / fallback to index 0 used)
    in_fov = fov_mask[S[:, :, 0], S[:, :, 1]]                 # (B, T) bool
    first = jnp.argmax(in_fov.astype(jnp.int32), axis=1)
    S0_coord = S[jnp.arange(B), first]                        # (B, 2)
    S1_coord = S[:, -1, :2]                                   # (B, 2)
    S0 = S0_coord[:, 0] * W + S0_coord[:, 1]
    S1 = S1_coord[:, 0] * W + S1_coord[:, 1]
    return S0, S1


def greedy_rollout(policy_flat, S0, H, W, action_horizon):
    """torch.no_grad greedy rollout, as one lax.scan + one scatter-add."""
    B = policy_flat.shape[0]
    most_likely_action = jnp.argmax(policy_flat, axis=1)      # (B, n_states)
    coord0 = jnp.stack([S0 // W, S0 % W], axis=1).astype(jnp.int32)

    def step(St, _):
        action = most_likely_action[jnp.arange(B), St]
        coord = jnp.stack([St // W, St % W], axis=1) + DYNAMICS[action]
        coord = jnp.stack([jnp.clip(coord[:, 0], 0, H - 1),
                           jnp.clip(coord[:, 1], 0, W - 1)], axis=1)
        St_new = coord[:, 0] * W + coord[:, 1]
        return St_new, coord

    _, coords = lax.scan(step, S0, None, length=action_horizon - 1)
    states = jnp.concatenate([coord0[None], coords.astype(jnp.int32)], axis=0)
    states = jnp.transpose(states, (1, 0, 2))                 # (B, T, 2)
    bidx = jnp.broadcast_to(jnp.arange(B)[:, None], (B, action_horizon))
    states_grid = jnp.zeros((B, H, W), jnp.float32).at[
        bidx, states[..., 0], states[..., 1]].add(1.0)
    return states, states_grid


def expected_state_visitation_frequency(policy, expert, fov_mask, transition_probs,
                                        action_horizon=ACTION_HORIZON,
                                        ds_map=DS_MAP,
                                        temperature=TEMPERATURE,
                                        sharpen_method=POLICY_SHARPEN,
                                        zero_terminal_state=ZERO_TERMINAL_STATE):
    B, A, H, W = policy.shape
    n_states = H * W

    S0, S1 = expert_to_endpoints(expert, fov_mask, H, W, ds_map)

    # ---- fused Pallas kernel: sharpen + horizon propagation + exp_svf sum ----
    exp_svf = fused_expected_svf(policy, S0, S1, transition_probs,
                                 action_horizon=action_horizon,
                                 temperature=temperature,
                                 sharpen_method=sharpen_method,
                                 zero_terminal_state=zero_terminal_state)

    # ---- greedy rollout (torch.no_grad block): single scan + scatter ---------
    policy_flat = policy.reshape(B, A, n_states)
    states, states_grid = greedy_rollout(policy_flat, S0, H, W, action_horizon)

    return {"exp_svf": exp_svf, "state_preds_grid": states_grid,
            "state_preds": states}


# ------------------------------ pure-JAX oracle -------------------------------
def reference_expected_svf(policy, S0, S1, transition_probs, *, action_horizon,
                           temperature, sharpen_method, zero_terminal_state):
    """Mirror of the torch code (grouped F.conv2d) used only for validation."""
    B, A, H, W = policy.shape
    n = H * W
    if sharpen_method == "sharpen":
        logits = policy - policy.max(axis=1, keepdims=True)
        pol2d = jax.nn.softmax(logits / temperature, axis=1)
    else:
        pol2d = policy
    mu = jnp.zeros((B, action_horizon, n), jnp.float32)
    mu = mu.at[jnp.arange(B), 0, S0].set(1.0)
    for t in range(1, action_horizon):
        if zero_terminal_state:
            mu = mu.at[jnp.arange(B), t - 1, S1].set(0.0)
        prev = mu[:, t - 1].reshape(B, 1, H, W)
        pm = pol2d * prev
        new = lax.conv_general_dilated(
            pm, transition_probs, window_strides=(1, 1),
            padding=((1, 1), (1, 1)),
            dimension_numbers=("NCHW", "OIHW", "NCHW"),
            feature_group_count=A,
            precision=lax.Precision.HIGHEST)
        mu = mu.at[:, t].set(new.sum(axis=1).reshape(B, n))
    return mu.sum(axis=1).reshape(B, H, W)


# --------------------------------- demo --------------------------------------
if __name__ == "__main__":
    key = jax.random.PRNGKey(0)
    B, A, H, W = 2, N_ACTIONS, MAP_H, MAP_W
    T_EXP = 8

    k_pol, k_row, k_col = jax.random.split(key, 3)

    # policy produced by the (external) traversability head: (B, A, H, W)
    policy = jax.random.normal(k_pol, (B, A, H, W), dtype=jnp.float32)

    # expert poses: (B, T, 3, 3) SE(2)-style transforms; translation in [:, :, :2, 2]
    rows = jax.random.randint(k_row, (B, T_EXP), 0, H).astype(jnp.float32)
    cols = jax.random.randint(k_col, (B, T_EXP), W // 4, 3 * W // 4).astype(jnp.float32)
    expert = jnp.tile(jnp.eye(3, dtype=jnp.float32)[None, None], (B, T_EXP, 1, 1))
    expert = expert.at[:, :, 0, 2].set(rows)
    expert = expert.at[:, :, 1, 2].set(cols)

    fov_mask = make_fov_mask(H, W)
    transition_probs = make_transition_probs()

    outputs = expected_state_visitation_frequency(policy, expert, fov_mask,
                                                  transition_probs)
    outputs = jax.tree_util.tree_map(jax.block_until_ready, outputs)

    assert outputs["exp_svf"].shape == (B, H, W)
    assert outputs["state_preds"].shape == (B, ACTION_HORIZON, 2)
    assert outputs["state_preds_grid"].shape == (B, H, W)
    assert bool(jnp.all(outputs["exp_svf"] >= 0)), \
        "Expected state visitation frequencies are negative"

    # Pure-JAX oracle for the fused kernel (exact softmax now -> tight tol).
    S0, S1 = expert_to_endpoints(expert, fov_mask, H, W, DS_MAP)
    ref = reference_expected_svf(policy, S0, S1, transition_probs,
                                 action_horizon=ACTION_HORIZON,
                                 temperature=TEMPERATURE,
                                 sharpen_method=POLICY_SHARPEN,
                                 zero_terminal_state=ZERO_TERMINAL_STATE)
    max_err = float(jnp.max(jnp.abs(outputs["exp_svf"] - ref)))
    assert bool(jnp.allclose(outputs["exp_svf"], ref, rtol=1e-5, atol=1e-5)), \
        f"exp_svf mismatch vs reference; max abs err = {max_err}"

    print("KERNEL_OK")
</pallas_src>

<mosaic_0001>
module attributes {stable_mosaic.version = 11 : i64} {
  func.func @_fused_esvf_kernel(%arg0: memref<2x1xi32, #tpu.memory_space<vmem>>, %arg1: memref<2x1xi32, #tpu.memory_space<vmem>>, %arg2: memref<1x8x512xf32, #tpu.memory_space<vmem>>, %arg3: memref<2x8x512xf32, #tpu.memory_space<vmem>>, %arg4: memref<2x512xf32, #tpu.memory_space<vmem>>) attributes {dimension_semantics = [], scalar_prefetch = 0 : i64, scratch_operands = 0 : i64, tpu.core_type = #tpu.core_type<tc>} {
    %c0 = arith.constant 0 : index
    %c0_0 = arith.constant 0 : index
    %c0_1 = arith.constant 0 : index
    %0 = vector.load %arg3[%c0, %c0_0, %c0_1] : memref<2x8x512xf32, #tpu.memory_space<vmem>>, vector<2x8x512xf32>
    %cst = arith.constant dense<0xFF800000> : vector<2x512xf32>
    %1 = vector.multi_reduction <maximumf>, %0, %cst [1] : vector<2x8x512xf32> to vector<2x512xf32>
    %2 = vector.shape_cast %1 : vector<2x512xf32> to vector<2x1x512xf32>
    %3 = vector.broadcast %2 : vector<2x1x512xf32> to vector<2x8x512xf32>
    %4 = arith.subf %0, %3 : vector<2x8x512xf32>
    %cst_2 = arith.constant 1.000000e+00 : f32
    %5 = vector.broadcast %cst_2 : f32 to vector<2x8x512xf32>
    %6 = arith.mulf %4, %5 : vector<2x8x512xf32>
    %7 = math.exp %6 : vector<2x8x512xf32>
    %cst_3 = arith.constant dense<0.000000e+00> : vector<2x512xf32>
    %8 = vector.multi_reduction <add>, %7, %cst_3 [1] : vector<2x8x512xf32> to vector<2x512xf32>
    %9 = vector.shape_cast %8 : vector<2x512xf32> to vector<2x1x512xf32>
    %10 = vector.broadcast %9 : vector<2x1x512xf32> to vector<2x8x512xf32>
    %11 = arith.divf %7, %10 : vector<2x8x512xf32>
    %c0_4 = arith.constant 0 : index
    %c0_5 = arith.constant 0 : index
    %c0_6 = arith.constant 0 : index
    %12 = vector.load %arg2[%c0_4, %c0_5, %c0_6] : memref<1x8x512xf32, #tpu.memory_space<vmem>>, vector<1x8x512xf32>
    %13 = vector.broadcast %12 : vector<1x8x512xf32> to vector<2x8x512xf32>
    %14 = arith.mulf %11, %13 : vector<2x8x512xf32>
    %15 = tpu.iota {dimensions = array<i32: 1>} : vector<1x512xi32>
    %c0_7 = arith.constant 0 : index
    %c0_8 = arith.constant 0 : index
    %16 = vector.load %arg0[%c0_7, %c0_8] : memref<2x1xi32, #tpu.memory_space<vmem>>, vector<2x1xi32>
    %17 = vector.broadcast %15 : vector<1x512xi32> to vector<2x512xi32>
    %18 = vector.broadcast %16 : vector<2x1xi32> to vector<2x512xi32>
    %19 = arith.cmpi eq, %17, %18 : vector<2x512xi32>
    %20 = arith.extui %19 : vector<2x512xi1> to vector<2x512xi32>
    %21 = arith.sitofp %20 : vector<2x512xi32> to vector<2x512xf32>
    %cst_9 = arith.constant 0.000000e+00 : f32
    %22 = vector.broadcast %cst_9 : f32 to vector<2x512xf32>
    %c0_10 = arith.constant 0 : index
    %c0_11 = arith.constant 0 : index
    %23 = vector.load %arg1[%c0_10, %c0_11] : memref<2x1xi32, #tpu.memory_space<vmem>>, vector<2x1xi32>
    %24 = vector.broadcast %15 : vector<1x512xi32> to vector<2x512xi32>
    %25 = vector.broadcast %23 : vector<2x1xi32> to vector<2x512xi32>
    %26 = arith.cmpi eq, %24, %25 : vector<2x512xi32>
    %27 = arith.extui %26 : vector<2x512xi1> to vector<2x512xi32>
    %28 = arith.sitofp %27 : vector<2x512xi32> to vector<2x512xf32>
    %cst_12 = arith.constant 1.000000e+00 : f32
    %29 = vector.broadcast %cst_12 : f32 to vector<2x512xf32>
    %30 = arith.subf %29, %28 : vector<2x512xf32>
    %c0_i32 = arith.constant 0 : i32
    %31 = arith.mulf %21, %30 : vector<2x512xf32>
    %32 = arith.addf %22, %31 : vector<2x512xf32>
    %33 = vector.shape_cast %31 : vector<2x512xf32> to vector<2x1x512xf32>
    %34 = vector.broadcast %33 : vector<2x1x512xf32> to vector<2x8x512xf32>
    %35 = arith.mulf %14, %34 : vector<2x8x512xf32>
    %cst_13 = arith.constant 0.000000e+00 : f32
    %36 = vector.broadcast %cst_13 : f32 to vector<2x512xf32>
    %37 = vector.extract_strided_slice %35 {offsets = [0, 0, 0], sizes = [2, 1, 512], strides = [1, 1, 1]} : vector<2x8x512xf32> to vector<2x1x512xf32>
    %38 = vector.shape_cast %37 : vector<2x1x512xf32> to vector<2x512xf32>
    %c479_i32 = arith.constant 479 : i32
    %39 = tpu.dynamic_rotate %38 by %c479_i32 dim 1 : vector<2x512xf32>, i32 -> vector<2x512xf32>
    %40 = arith.addf %36, %39 : vector<2x512xf32>
    %41 = vector.extract_strided_slice %35 {offsets = [0, 1, 0], sizes = [2, 1, 512], strides = [1, 1, 1]} : vector<2x8x512xf32> to vector<2x1x512xf32>
    %42 = vector.shape_cast %41 : vector<2x1x512xf32> to vector<2x512xf32>
    %c480_i32 = arith.constant 480 : i32
    %43 = tpu.dynamic_rotate %42 by %c480_i32 dim 1 : vector<2x512xf32>, i32 -> vector<2x512xf32>
    %44 = arith.addf %40, %43 : vector<2x512xf32>
    %45 = vector.extract_strided_slice %35 {offsets = [0, 2, 0], sizes = [2, 1, 512], strides = [1, 1, 1]} : vector<2x8x512xf32> to vector<2x1x512xf32>
    %46 = vector.shape_cast %45 : vector<2x1x512xf32> to vector<2x512xf32>
    %c481_i32 = arith.constant 481 : i32
    %47 = tpu.dynamic_rotate %46 by %c481_i32 dim 1 : vector<2x512xf32>, i32 -> vector<2x512xf32>
    %48 = arith.addf %44, %47 : vector<2x512xf32>
    %49 = vector.extract_strided_slice %35 {offsets = [0, 3, 0], sizes = [2, 1, 512], strides = [1, 1, 1]} : vector<2x8x512xf32> to vector<2x1x512xf32>
    %50 = vector.shape_cast %49 : vector<2x1x512xf32> to vector<2x512xf32>
    %c511_i32 = arith.constant 511 : i32
    %51 = tpu.dynamic_rotate %50 by %c511_i32 dim 1 : vector<2x512xf32>, i32 -> vector<2x512xf32>
    %52 = arith.addf %48, %51 : vector<2x512xf32>
    %53 = vector.extract_strided_slice %35 {offsets = [0, 4, 0], sizes = [2, 1, 512], strides = [1, 1, 1]} : vector<2x8x512xf32> to vector<2x1x512xf32>
    %54 = vector.shape_cast %53 : vector<2x1x512xf32> to vector<2x512xf32>
    %c1_i32 = arith.constant 1 : i32
    %55 = tpu.dynamic_rotate %54 by %c1_i32 dim 1 : vector<2x512xf32>, i32 -> vector<2x512xf32>
    %56 = arith.addf %52, %55 : vector<2x512xf32>
    %57 = vector.extract_strided_slice %35 {offsets = [0, 5, 0], sizes = [2, 1, 512], strides = [1, 1, 1]} : vector<2x8x512xf32> to vector<2x1x512xf32>
    %58 = vector.shape_cast %57 : vector<2x1x512xf32> to vector<2x512xf32>
    %c31_i32 = arith.constant 31 : i32
    %59 = tpu.dynamic_rotate %58 by %c31_i32 dim 1 : vector<2x512xf32>, i32 -> vector<2x512xf32>
    %60 = arith.addf %56, %59 : vector<2x512xf32>
    %61 = vector.extract_strided_slice %35 {offsets = [0, 6, 0], sizes = [2, 1, 512], strides = [1, 1, 1]} : vector<2x8x512xf32> to vector<2x1x512xf32>
    %62 = vector.shape_cast %61 : vector<2x1x512xf32> to vector<2x512xf32>
    %c32_i32 = arith.constant 32 : i32
    %63 = tpu.dynamic_rotate %62 by %c32_i32 dim 1 : vector<2x512xf32>, i32 -> vector<2x512xf32>
    %64 = arith.addf %60, %63 : vector<2x512xf32>
    %65 = vector.extract_strided_slice %35 {offsets = [0, 7, 0], sizes = [2, 1, 512], strides = [1, 1, 1]} : vector<2x8x512xf32> to vector<2x1x512xf32>
    %66 = vector.shape_cast %65 : vector<2x1x512xf32> to vector<2x512xf32>
    %c33_i32 = arith.constant 33 : i32
    %67 = tpu.dynamic_rotate %66 by %c33_i32 dim 1 : vector<2x512xf32>, i32 -> vector<2x512xf32>
    %68 = arith.addf %64, %67 : vector<2x512xf32>
    %c1_i32_14 = arith.constant 1 : i32
    %69 = arith.mulf %68, %30 : vector<2x512xf32>
    %70 = arith.addf %32, %69 : vector<2x512xf32>
    %71 = vector.shape_cast %69 : vector<2x512xf32> to vector<2x1x512xf32>
    %72 = vector.broadcast %71 : vector<2x1x512xf32> to vector<2x8x512xf32>
    %73 = arith.mulf %14, %72 : vector<2x8x512xf32>
    %cst_15 = arith.constant 0.000000e+00 : f32
    %74 = vector.broadcast %cst_15 : f32 to vector<2x512xf32>
    %75 = vector.extract_strided_slice %73 {offsets = [0, 0, 0], sizes = [2, 1, 512], strides = [1, 1, 1]} : vector<2x8x512xf32> to vector<2x1x512xf32>
    %76 = vector.shape_cast %75 : vector<2x1x512xf32> to vector<2x512xf32>
    %c479_i32_16 = arith.constant 479 : i32
    %77 = tpu.dynamic_rotate %76 by %c479_i32_16 dim 1 : vector<2x512xf32>, i32 -> vector<2x512xf32>
    %78 = arith.addf %74, %77 : vector<2x512xf32>
    %79 = vector.extract_strided_slice %73 {offsets = [0, 1, 0], sizes = [2, 1, 512], strides = [1, 1, 1]} : vector<2x8x512xf32> to vector<2x1x512xf32>
    %80 = vector.shape_cast %79 : vector<2x1x512xf32> to vector<2x512xf32>
    %c480_i32_17 = arith.constant 480 : i32
    %81 = tpu.dynamic_rotate %80 by %c480_i32_17 dim 1 : vector<2x512xf32>, i32 -> vector<2x512xf32>
    %82 = arith.addf %78, %81 : vector<2x512xf32>
    %83 = vector.extract_strided_slice %73 {offsets = [0, 2, 0], sizes = [2, 1, 512], strides = [1, 1, 1]} : vector<2x8x512xf32> to vector<2x1x512xf32>
    %84 = vector.shape_cast %83 : vector<2x1x512xf32> to vector<2x512xf32>
    %c481_i32_18 = arith.constant 481 : i32
    %85 = tpu.dynamic_rotate %84 by %c481_i32_18 dim 1 : vector<2x512xf32>, i32 -> vector<2x512xf32>
    %86 = arith.addf %82, %85 : vector<2x512xf32>
    %87 = vector.extract_strided_slice %73 {offsets = [0, 3, 0], sizes = [2, 1, 512], strides = [1, 1, 1]} : vector<2x8x512xf32> to vector<2x1x512xf32>
    %88 = vector.shape_cast %87 : vector<2x1x512xf32> to vector<2x512xf32>
    %c511_i32_19 = arith.constant 511 : i32
    %89 = tpu.dynamic_rotate %88 by %c511_i32_19 dim 1 : vector<2x512xf32>, i32 -> vector<2x512xf32>
    %90 = arith.addf %86, %89 : vector<2x512xf32>
    %91 = vector.extract_strided_slice %73 {offsets = [0, 4, 0], sizes = [2, 1, 512], strides = [1, 1, 1]} : vector<2x8x512xf32> to vector<2x1x512xf32>
    %92 = vector.shape_cast %91 : vector<2x1x512xf32> to vector<2x512xf32>
    %c1_i32_20 = arith.constant 1 : i32
    %93 = tpu.dynamic_rotate %92 by %c1_i32_20 dim 1 : vector<2x512xf32>, i32 -> vector<2x512xf32>
    %94 = arith.addf %90, %93 : vector<2x512xf32>
    %95 = vector.extract_strided_slice %73 {offsets = [0, 5, 0], sizes = [2, 1, 512], strides = [1, 1, 1]} : vector<2x8x512xf32> to vector<2x1x512xf32>
    %96 = vector.shape_cast %95 : vector<2x1x512xf32> to vector<2x512xf32>
    %c31_i32_21 = arith.constant 31 : i32
    %97 = tpu.dynamic_rotate %96 by %c31_i32_21 dim 1 : vector<2x512xf32>, i32 -> vector<2x512xf32>
    %98 = arith.addf %94, %97 : vector<2x512xf32>
    %99 = vector.extract_strided_slice %73 {offsets = [0, 6, 0], sizes = [2, 1, 512], strides = [1, 1, 1]} : vector<2x8x512xf32> to vector<2x1x512xf32>
    %100 = vector.shape_cast %99 : vector<2x1x512xf32> to vector<2x512xf32>
    %c32_i32_22 = arith.constant 32 : i32
    %101 = tpu.dynamic_rotate %100 by %c32_i32_22 dim 1 : vector<2x512xf32>, i32 -> vector<2x512xf32>
    %102 = arith.addf %98, %101 : vector<2x512xf32>
    %103 = vector.extract_strided_slice %73 {offsets = [0, 7, 0], sizes = [2, 1, 512], strides = [1, 1, 1]} : vector<2x8x512xf32> to vector<2x1x512xf32>
    %104 = vector.shape_cast %103 : vector<2x1x512xf32> to vector<2x512xf32>
    %c33_i32_23 = arith.constant 33 : i32
    %105 = tpu.dynamic_rotate %104 by %c33_i32_23 dim 1 : vector<2x512xf32>, i32 -> vector<2x512xf32>
    %106 = arith.addf %102, %105 : vector<2x512xf32>
    %c2_i32 = arith.constant 2 : i32
    %107 = arith.mulf %106, %30 : vector<2x512xf32>
    %108 = arith.addf %70, %107 : vector<2x512xf32>
    %109 = vector.shape_cast %107 : vector<2x512xf32> to vector<2x1x512xf32>
    %110 = vector.broadcast %109 : vector<2x1x512xf32> to vector<2x8x512xf32>
    %111 = arith.mulf %14, %110 : vector<2x8x512xf32>
    %cst_24 = arith.constant 0.000000e+00 : f32
    %112 = vector.broadcast %cst_24 : f32 to vector<2x512xf32>
    %113 = vector.extract_strided_slice %111 {offsets = [0, 0, 0], sizes = [2, 1, 512], strides = [1, 1, 1]} : vector<2x8x512xf32> to vector<2x1x512xf32>
    %114 = vector.shape_cast %113 : vector<2x1x512xf32> to vector<2x512xf32>
    %c479_i32_25 = arith.constant 479 : i32
    %115 = tpu.dynamic_rotate %114 by %c479_i32_25 dim 1 : vector<2x512xf32>, i32 -> vector<2x512xf32>
    %116 = arith.addf %112, %115 : vector<2x512xf32>
    %117 = vector.extract_strided_slice %111 {offsets = [0, 1, 0], sizes = [2, 1, 512], strides = [1, 1, 1]} : vector<2x8x512xf32> to vector<2x1x512xf32>
    %118 = vector.shape_cast %117 : vector<2x1x512xf32> to vector<2x512xf32>
    %c480_i32_26 = arith.constant 480 : i32
    %119 = tpu.dynamic_rotate %118 by %c480_i32_26 dim 1 : vector<2x512xf32>, i32 -> vector<2x512xf32>
    %120 = arith.addf %116, %119 : vector<2x512xf32>
    %121 = vector.extract_strided_slice %111 {offsets = [0, 2, 0], sizes = [2, 1, 512], strides = [1, 1, 1]} : vector<2x8x512xf32> to vector<2x1x512xf32>
    %122 = vector.shape_cast %121 : vector<2x1x512xf32> to vector<2x512xf32>
    %c481_i32_27 = arith.constant 481 : i32
    %123 = tpu.dynamic_rotate %122 by %c481_i32_27 dim 1 : vector<2x512xf32>, i32 -> vector<2x512xf32>
    %124 = arith.addf %120, %123 : vector<2x512xf32>
    %125 = vector.extract_strided_slice %111 {offsets = [0, 3, 0], sizes = [2, 1, 512], strides = [1, 1, 1]} : vector<2x8x512xf32> to vector<2x1x512xf32>
    %126 = vector.shape_cast %125 : vector<2x1x512xf32> to vector<2x512xf32>
    %c511_i32_28 = arith.constant 511 : i32
    %127 = tpu.dynamic_rotate %126 by %c511_i32_28 dim 1 : vector<2x512xf32>, i32 -> vector<2x512xf32>
    %128 = arith.addf %124, %127 : vector<2x512xf32>
    %129 = vector.extract_strided_slice %111 {offsets = [0, 4, 0], sizes = [2, 1, 512], strides = [1, 1, 1]} : vector<2x8x512xf32> to vector<2x1x512xf32>
    %130 = vector.shape_cast %129 : vector<2x1x512xf32> to vector<2x512xf32>
    %c1_i32_29 = arith.constant 1 : i32
    %131 = tpu.dynamic_rotate %130 by %c1_i32_29 dim 1 : vector<2x512xf32>, i32 -> vector<2x512xf32>
    %132 = arith.addf %128, %131 : vector<2x512xf32>
    %133 = vector.extract_strided_slice %111 {offsets = [0, 5, 0], sizes = [2, 1, 512], strides = [1, 1, 1]} : vector<2x8x512xf32> to vector<2x1x512xf32>
    %134 = vector.shape_cast %133 : vector<2x1x512xf32> to vector<2x512xf32>
    %c31_i32_30 = arith.constant 31 : i32
    %135 = tpu.dynamic_rotate %134 by %c31_i32_30 dim 1 : vector<2x512xf32>, i32 -> vector<2x512xf32>
    %136 = arith.addf %132, %135 : vector<2x512xf32>
    %137 = vector.extract_strided_slice %111 {offsets = [0, 6, 0], sizes = [2, 1, 512], strides = [1, 1, 1]} : vector<2x8x512xf32> to vector<2x1x512xf32>
    %138 = vector.shape_cast %137 : vector<2x1x512xf32> to vector<2x512xf32>
    %c32_i32_31 = arith.constant 32 : i32
    %139 = tpu.dynamic_rotate %138 by %c32_i32_31 dim 1 : vector<2x512xf32>, i32 -> vector<2x512xf32>
    %140 = arith.addf %136, %139 : vector<2x512xf32>
    %141 = vector.extract_strided_slice %111 {offsets = [0, 7, 0], sizes = [2, 1, 512], strides = [1, 1, 1]} : vector<2x8x512xf32> to vector<2x1x512xf32>
    %142 = vector.shape_cast %141 : vector<2x1x512xf32> to vector<2x512xf32>
    %c33_i32_32 = arith.constant 33 : i32
    %143 = tpu.dynamic_rotate %142 by %c33_i32_32 dim 1 : vector<2x512xf32>, i32 -> vector<2x512xf32>
    %144 = arith.addf %140, %143 : vector<2x512xf32>
    %c3_i32 = arith.constant 3 : i32
    %145 = arith.mulf %144, %30 : vector<2x512xf32>
    %146 = arith.addf %108, %145 : vector<2x512xf32>
    %147 = vector.shape_cast %145 : vector<2x512xf32> to vector<2x1x512xf32>
    %148 = vector.broadcast %147 : vector<2x1x512xf32> to vector<2x8x512xf32>
    %149 = arith.mulf %14, %148 : vector<2x8x512xf32>
    %cst_33 = arith.constant 0.000000e+00 : f32
    %150 = vector.broadcast %cst_33 : f32 to vector<2x512xf32>
    %151 = vector.extract_strided_slice %149 {offsets = [0, 0, 0], sizes = [2, 1, 512], strides = [1, 1, 1]} : vector<2x8x512xf32> to vector<2x1x512xf32>
    %152 = vector.shape_cast %151 : vector<2x1x512xf32> to vector<2x512xf32>
    %c479_i32_34 = arith.constant 479 : i32
    %153 = tpu.dynamic_rotate %152 by %c479_i32_34 dim 1 : vector<2x512xf32>, i32 -> vector<2x512xf32>
    %154 = arith.addf %150, %153 : vector<2x512xf32>
    %155 = vector.extract_strided_slice %149 {offsets = [0, 1, 0], sizes = [2, 1, 512], strides = [1, 1, 1]} : vector<2x8x512xf32> to vector<2x1x512xf32>
    %156 = vector.shape_cast %155 : vector<2x1x512xf32> to vector<2x512xf32>
    %c480_i32_35 = arith.constant 480 : i32
    %157 = tpu.dynamic_rotate %156 by %c480_i32_35 dim 1 : vector<2x512xf32>, i32 -> vector<2x512xf32>
    %158 = arith.addf %154, %157 : vector<2x512xf32>
    %159 = vector.extract_strided_slice %149 {offsets = [0, 2, 0], sizes = [2, 1, 512], strides = [1, 1, 1]} : vector<2x8x512xf32> to vector<2x1x512xf32>
    %160 = vector.shape_cast %159 : vector<2x1x512xf32> to vector<2x512xf32>
    %c481_i32_36 = arith.constant 481 : i32
    %161 = tpu.dynamic_rotate %160 by %c481_i32_36 dim 1 : vector<2x512xf32>, i32 -> vector<2x512xf32>
    %162 = arith.addf %158, %161 : vector<2x512xf32>
    %163 = vector.extract_strided_slice %149 {offsets = [0, 3, 0], sizes = [2, 1, 512], strides = [1, 1, 1]} : vector<2x8x512xf32> to vector<2x1x512xf32>
    %164 = vector.shape_cast %163 : vector<2x1x512xf32> to vector<2x512xf32>
    %c511_i32_37 = arith.constant 511 : i32
    %165 = tpu.dynamic_rotate %164 by %c511_i32_37 dim 1 : vector<2x512xf32>, i32 -> vector<2x512xf32>
    %166 = arith.addf %162, %165 : vector<2x512xf32>
    %167 = vector.extract_strided_slice %149 {offsets = [0, 4, 0], sizes = [2, 1, 512], strides = [1, 1, 1]} : vector<2x8x512xf32> to vector<2x1x512xf32>
    %168 = vector.shape_cast %167 : vector<2x1x512xf32> to vector<2x512xf32>
    %c1_i32_38 = arith.constant 1 : i32
    %169 = tpu.dynamic_rotate %168 by %c1_i32_38 dim 1 : vector<2x512xf32>, i32 -> vector<2x512xf32>
    %170 = arith.addf %166, %169 : vector<2x512xf32>
    %171 = vector.extract_strided_slice %149 {offsets = [0, 5, 0], sizes = [2, 1, 512], strides = [1, 1, 1]} : vector<2x8x512xf32> to vector<2x1x512xf32>
    %172 = vector.shape_cast %171 : vector<2x1x512xf32> to vector<2x512xf32>
    %c31_i32_39 = arith.constant 31 : i32
    %173 = tpu.dynamic_rotate %172 by %c31_i32_39 dim 1 : vector<2x512xf32>, i32 -> vector<2x512xf32>
    %174 = arith.addf %170, %173 : vector<2x512xf32>
    %175 = vector.extract_strided_slice %149 {offsets = [0, 6, 0], sizes = [2, 1, 512], strides = [1, 1, 1]} : vector<2x8x512xf32> to vector<2x1x512xf32>
    %176 = vector.shape_cast %175 : vector<2x1x512xf32> to vector<2x512xf32>
    %c32_i32_40 = arith.constant 32 : i32
    %177 = tpu.dynamic_rotate %176 by %c32_i32_40 dim 1 : vector<2x512xf32>, i32 -> vector<2x512xf32>
    %178 = arith.addf %174, %177 : vector<2x512xf32>
    %179 = vector.extract_strided_slice %149 {offsets = [0, 7, 0], sizes = [2, 1, 512], strides = [1, 1, 1]} : vector<2x8x512xf32> to vector<2x1x512xf32>
    %180 = vector.shape_cast %179 : vector<2x1x512xf32> to vector<2x512xf32>
    %c33_i32_41 = arith.constant 33 : i32
    %181 = tpu.dynamic_rotate %180 by %c33_i32_41 dim 1 : vector<2x512xf32>, i32 -> vector<2x512xf32>
    %182 = arith.addf %178, %181 : vector<2x512xf32>
    %c4_i32 = arith.constant 4 : i32
    %183 = arith.mulf %182, %30 : vector<2x512xf32>
    %184 = arith.addf %146, %183 : vector<2x512xf32>
    %185 = vector.shape_cast %183 : vector<2x512xf32> to vector<2x1x512xf32>
    %186 = vector.broadcast %185 : vector<2x1x512xf32> to vector<2x8x512xf32>
    %187 = arith.mulf %14, %186 : vector<2x8x512xf32>
    %cst_42 = arith.constant 0.000000e+00 : f32
    %188 = vector.broadcast %cst_42 : f32 to vector<2x512xf32>
    %189 = vector.extract_strided_slice %187 {offsets = [0, 0, 0], sizes = [2, 1, 512], strides = [1, 1, 1]} : vector<2x8x512xf32> to vector<2x1x512xf32>
    %190 = vector.shape_cast %189 : vector<2x1x512xf32> to vector<2x512xf32>
    %c479_i32_43 = arith.constant 479 : i32
    %191 = tpu.dynamic_rotate %190 by %c479_i32_43 dim 1 : vector<2x512xf32>, i32 -> vector<2x512xf32>
    %192 = arith.addf %188, %191 : vector<2x512xf32>
    %193 = vector.extract_strided_slice %187 {offsets = [0, 1, 0], sizes = [2, 1, 512], strides = [1, 1, 1]} : vector<2x8x512xf32> to vector<2x1x512xf32>
    %194 = vector.shape_cast %193 : vector<2x1x512xf32> to vector<2x512xf32>
    %c480_i32_44 = arith.constant 480 : i32
    %195 = tpu.dynamic_rotate %194 by %c480_i32_44 dim 1 : vector<2x512xf32>, i32 -> vector<2x512xf32>
    %196 = arith.addf %192, %195 : vector<2x512xf32>
    %197 = vector.extract_strided_slice %187 {offsets = [0, 2, 0], sizes = [2, 1, 512], strides = [1, 1, 1]} : vector<2x8x512xf32> to vector<2x1x512xf32>
    %198 = vector.shape_cast %197 : vector<2x1x512xf32> to vector<2x512xf32>
    %c481_i32_45 = arith.constant 481 : i32
    %199 = tpu.dynamic_rotate %198 by %c481_i32_45 dim 1 : vector<2x512xf32>, i32 -> vector<2x512xf32>
    %200 = arith.addf %196, %199 : vector<2x512xf32>
    %201 = vector.extract_strided_slice %187 {offsets = [0, 3, 0], sizes = [2, 1, 512], strides = [1, 1, 1]} : vector<2x8x512xf32> to vector<2x1x512xf32>
    %202 = vector.shape_cast %201 : vector<2x1x512xf32> to vector<2x512xf32>
    %c511_i32_46 = arith.constant 511 : i32
    %203 = tpu.dynamic_rotate %202 by %c511_i32_46 dim 1 : vector<2x512xf32>, i32 -> vector<2x512xf32>
    %204 = arith.addf %200, %203 : vector<2x512xf32>
    %205 = vector.extract_strided_slice %187 {offsets = [0, 4, 0], sizes = [2, 1, 512], strides = [1, 1, 1]} : vector<2x8x512xf32> to vector<2x1x512xf32>
    %206 = vector.shape_cast %205 : vector<2x1x512xf32> to vector<2x512xf32>
    %c1_i32_47 = arith.constant 1 : i32
    %207 = tpu.dynamic_rotate %206 by %c1_i32_47 dim 1 : vector<2x512xf32>, i32 -> vector<2x512xf32>
    %208 = arith.addf %204, %207 : vector<2x512xf32>
    %209 = vector.extract_strided_slice %187 {offsets = [0, 5, 0], sizes = [2, 1, 512], strides = [1, 1, 1]} : vector<2x8x512xf32> to vector<2x1x512xf32>
    %210 = vector.shape_cast %209 : vector<2x1x512xf32> to vector<2x512xf32>
    %c31_i32_48 = arith.constant 31 : i32
    %211 = tpu.dynamic_rotate %210 by %c31_i32_48 dim 1 : vector<2x512xf32>, i32 -> vector<2x512xf32>
    %212 = arith.addf %208, %211 : vector<2x512xf32>
    %213 = vector.extract_strided_slice %187 {offsets = [0, 6, 0], sizes = [2, 1, 512], strides = [1, 1, 1]} : vector<2x8x512xf32> to vector<2x1x512xf32>
    %214 = vector.shape_cast %213 : vector<2x1x512xf32> to vector<2x512xf32>
    %c32_i32_49 = arith.constant 32 : i32
    %215 = tpu.dynamic_rotate %214 by %c32_i32_49 dim 1 : vector<2x512xf32>, i32 -> vector<2x512xf32>
    %216 = arith.addf %212, %215 : vector<2x512xf32>
    %217 = vector.extract_strided_slice %187 {offsets = [0, 7, 0], sizes = [2, 1, 512], strides = [1, 1, 1]} : vector<2x8x512xf32> to vector<2x1x512xf32>
    %218 = vector.shape_cast %217 : vector<2x1x512xf32> to vector<2x512xf32>
    %c33_i32_50 = arith.constant 33 : i32
    %219 = tpu.dynamic_rotate %218 by %c33_i32_50 dim 1 : vector<2x512xf32>, i32 -> vector<2x512xf32>
    %220 = arith.addf %216, %219 : vector<2x512xf32>
    %c5_i32 = arith.constant 5 : i32
    %221 = arith.mulf %220, %30 : vector<2x512xf32>
    %222 = arith.addf %184, %221 : vector<2x512xf32>
    %223 = vector.shape_cast %221 : vector<2x512xf32> to vector<2x1x512xf32>
    %224 = vector.broadcast %223 : vector<2x1x512xf32> to vector<2x8x512xf32>
    %225 = arith.mulf %14, %224 : vector<2x8x512xf32>
    %cst_51 = arith.constant 0.000000e+00 : f32
    %226 = vector.broadcast %cst_51 : f32 to vector<2x512xf32>
    %227 = vector.extract_strided_slice %225 {offsets = [0, 0, 0], sizes = [2, 1, 512], strides = [1, 1, 1]} : vector<2x8x512xf32> to vector<2x1x512xf32>
    %228 = vector.shape_cast %227 : vector<2x1x512xf32> to vector<2x512xf32>
    %c479_i32_52 = arith.constant 479 : i32
    %229 = tpu.dynamic_rotate %228 by %c479_i32_52 dim 1 : vector<2x512xf32>, i32 -> vector<2x512xf32>
    %230 = arith.addf %226, %229 : vector<2x512xf32>
    %231 = vector.extract_strided_slice %225 {offsets = [0, 1, 0], sizes = [2, 1, 512], strides = [1, 1, 1]} : vector<2x8x512xf32> to vector<2x1x512xf32>
    %232 = vector.shape_cast %231 : vector<2x1x512xf32> to vector<2x512xf32>
    %c480_i32_53 = arith.constant 480 : i32
    %233 = tpu.dynamic_rotate %232 by %c480_i32_53 dim 1 : vector<2x512xf32>, i32 -> vector<2x512xf32>
    %234 = arith.addf %230, %233 : vector<2x512xf32>
    %235 = vector.extract_strided_slice %225 {offsets = [0, 2, 0], sizes = [2, 1, 512], strides = [1, 1, 1]} : vector<2x8x512xf32> to vector<2x1x512xf32>
    %236 = vector.shape_cast %235 : vector<2x1x512xf32> to vector<2x512xf32>
    %c481_i32_54 = arith.constant 481 : i32
    %237 = tpu.dynamic_rotate %236 by %c481_i32_54 dim 1 : vector<2x512xf32>, i32 -> vector<2x512xf32>
    %238 = arith.addf %234, %237 : vector<2x512xf32>
    %239 = vector.extract_strided_slice %225 {offsets = [0, 3, 0], sizes = [2, 1, 512], strides = [1, 1, 1]} : vector<2x8x512xf32> to vector<2x1x512xf32>
    %240 = vector.shape_cast %239 : vector<2x1x512xf32> to vector<2x512xf32>
    %c511_i32_55 = arith.constant 511 : i32
    %241 = tpu.dynamic_rotate %240 by %c511_i32_55 dim 1 : vector<2x512xf32>, i32 -> vector<2x512xf32>
    %242 = arith.addf %238, %241 : vector<2x512xf32>
    %243 = vector.extract_strided_slice %225 {offsets = [0, 4, 0], sizes = [2, 1, 512], strides = [1, 1, 1]} : vector<2x8x512xf32> to vector<2x1x512xf32>
    %244 = vector.shape_cast %243 : vector<2x1x512xf32> to vector<2x512xf32>
    %c1_i32_56 = arith.constant 1 : i32
    %245 = tpu.dynamic_rotate %244 by %c1_i32_56 dim 1 : vector<2x512xf32>, i32 -> vector<2x512xf32>
    %246 = arith.addf %242, %245 : vector<2x512xf32>
    %247 = vector.extract_strided_slice %225 {offsets = [0, 5, 0], sizes = [2, 1, 512], strides = [1, 1, 1]} : vector<2x8x512xf32> to vector<2x1x512xf32>
    %248 = vector.shape_cast %247 : vector<2x1x512xf32> to vector<2x512xf32>
    %c31_i32_57 = arith.constant 31 : i32
    %249 = tpu.dynamic_rotate %248 by %c31_i32_57 dim 1 : vector<2x512xf32>, i32 -> vector<2x512xf32>
    %250 = arith.addf %246, %249 : vector<2x512xf32>
    %251 = vector.extract_strided_slice %225 {offsets = [0, 6, 0], sizes = [2, 1, 512], strides = [1, 1, 1]} : vector<2x8x512xf32> to vector<2x1x512xf32>
    %252 = vector.shape_cast %251 : vector<2x1x512xf32> to vector<2x512xf32>
    %c32_i32_58 = arith.constant 32 : i32
    %253 = tpu.dynamic_rotate %252 by %c32_i32_58 dim 1 : vector<2x512xf32>, i32 -> vector<2x512xf32>
    %254 = arith.addf %250, %253 : vector<2x512xf32>
    %255 = vector.extract_strided_slice %225 {offsets = [0, 7, 0], sizes = [2, 1, 512], strides = [1, 1, 1]} : vector<2x8x512xf32> to vector<2x1x512xf32>
    %256 = vector.shape_cast %255 : vector<2x1x512xf32> to vector<2x512xf32>
    %c33_i32_59 = arith.constant 33 : i32
    %257 = tpu.dynamic_rotate %256 by %c33_i32_59 dim 1 : vector<2x512xf32>, i32 -> vector<2x512xf32>
    %258 = arith.addf %254, %257 : vector<2x512xf32>
    %c6_i32 = arith.constant 6 : i32
    %259 = arith.mulf %258, %30 : vector<2x512xf32>
    %260 = arith.addf %222, %259 : vector<2x512xf32>
    %261 = vector.shape_cast %259 : vector<2x512xf32> to vector<2x1x512xf32>
    %262 = vector.broadcast %261 : vector<2x1x512xf32> to vector<2x8x512xf32>
    %263 = arith.mulf %14, %262 : vector<2x8x512xf32>
    %cst_60 = arith.constant 0.000000e+00 : f32
    %264 = vector.broadcast %cst_60 : f32 to vector<2x512xf32>
    %265 = vector.extract_strided_slice %263 {offsets = [0, 0, 0], sizes = [2, 1, 512], strides = [1, 1, 1]} : vector<2x8x512xf32> to vector<2x1x512xf32>
    %266 = vector.shape_cast %265 : vector<2x1x512xf32> to vector<2x512xf32>
    %c479_i32_61 = arith.constant 479 : i32
    %267 = tpu.dynamic_rotate %266 by %c479_i32_61 dim 1 : vector<2x512xf32>, i32 -> vector<2x512xf32>
    %268 = arith.addf %264, %267 : vector<2x512xf32>
    %269 = vector.extract_strided_slice %263 {offsets = [0, 1, 0], sizes = [2, 1, 512], strides = [1, 1, 1]} : vector<2x8x512xf32> to vector<2x1x512xf32>
    %270 = vector.shape_cast %269 : vector<2x1x512xf32> to vector<2x512xf32>
    %c480_i32_62 = arith.constant 480 : i32
    %271 = tpu.dynamic_rotate %270 by %c480_i32_62 dim 1 : vector<2x512xf32>, i32 -> vector<2x512xf32>
    %272 = arith.addf %268, %271 : vector<2x512xf32>
    %273 = vector.extract_strided_slice %263 {offsets = [0, 2, 0], sizes = [2, 1, 512], strides = [1, 1, 1]} : vector<2x8x512xf32> to vector<2x1x512xf32>
    %274 = vector.shape_cast %273 : vector<2x1x512xf32> to vector<2x512xf32>
    %c481_i32_63 = arith.constant 481 : i32
    %275 = tpu.dynamic_rotate %274 by %c481_i32_63 dim 1 : vector<2x512xf32>, i32 -> vector<2x512xf32>
    %276 = arith.addf %272, %275 : vector<2x512xf32>
    %277 = vector.extract_strided_slice %263 {offsets = [0, 3, 0], sizes = [2, 1, 512], strides = [1, 1, 1]} : vector<2x8x512xf32> to vector<2x1x512xf32>
    %278 = vector.shape_cast %277 : vector<2x1x512xf32> to vector<2x512xf32>
    %c511_i32_64 = arith.constant 511 : i32
    %279 = tpu.dynamic_rotate %278 by %c511_i32_64 dim 1 : vector<2x512xf32>, i32 -> vector<2x512xf32>
    %280 = arith.addf %276, %279 : vector<2x512xf32>
    %281 = vector.extract_strided_slice %263 {offsets = [0, 4, 0], sizes = [2, 1, 512], strides = [1, 1, 1]} : vector<2x8x512xf32> to vector<2x1x512xf32>
    %282 = vector.shape_cast %281 : vector<2x1x512xf32> to vector<2x512xf32>
    %c1_i32_65 = arith.constant 1 : i32
    %283 = tpu.dynamic_rotate %282 by %c1_i32_65 dim 1 : vector<2x512xf32>, i32 -> vector<2x512xf32>
    %284 = arith.addf %280, %283 : vector<2x512xf32>
    %285 = vector.extract_strided_slice %263 {offsets = [0, 5, 0], sizes = [2, 1, 512], strides = [1, 1, 1]} : vector<2x8x512xf32> to vector<2x1x512xf32>
    %286 = vector.shape_cast %285 : vector<2x1x512xf32> to vector<2x512xf32>
    %c31_i32_66 = arith.constant 31 : i32
    %287 = tpu.dynamic_rotate %286 by %c31_i32_66 dim 1 : vector<2x512xf32>, i32 -> vector<2x512xf32>
    %288 = arith.addf %284, %287 : vector<2x512xf32>
    %289 = vector.extract_strided_slice %263 {offsets = [0, 6, 0], sizes = [2, 1, 512], strides = [1, 1, 1]} : vector<2x8x512xf32> to vector<2x1x512xf32>
    %290 = vector.shape_cast %289 : vector<2x1x512xf32> to vector<2x512xf32>
    %c32_i32_67 = arith.constant 32 : i32
    %291 = tpu.dynamic_rotate %290 by %c32_i32_67 dim 1 : vector<2x512xf32>, i32 -> vector<2x512xf32>
    %292 = arith.addf %288, %291 : vector<2x512xf32>
    %293 = vector.extract_strided_slice %263 {offsets = [0, 7, 0], sizes = [2, 1, 512], strides = [1, 1, 1]} : vector<2x8x512xf32> to vector<2x1x512xf32>
    %294 = vector.shape_cast %293 : vector<2x1x512xf32> to vector<2x512xf32>
    %c33_i32_68 = arith.constant 33 : i32
    %295 = tpu.dynamic_rotate %294 by %c33_i32_68 dim 1 : vector<2x512xf32>, i32 -> vector<2x512xf32>
    %296 = arith.addf %292, %295 : vector<2x512xf32>
    %297 = arith.addf %260, %296 : vector<2x512xf32>
    %c0_69 = arith.constant 0 : index
    %c0_70 = arith.constant 0 : index
    %298 = vector.load %arg4[%c0_69, %c0_70] : memref<2x512xf32, #tpu.memory_space<vmem>>, vector<2x512xf32>
    tpu.vector_store %arg4[%c0_69, %c0_70], %297 {strides = array<i32>} : memref<2x512xf32, #tpu.memory_space<vmem>>, vector<2x512xf32>,
    return
  }
}

</mosaic_0001>

<llo_original>
// kernel: tpu_custom_call.1
$region0: #{tpu_custom_call.1}
  #allocation0 [shape = 'u32[]', space=smem, size = 0x4, offset = 0x4, fixed_abs, tag = 'smem constant byte address 0x4 - core index']
  #allocation1 [shape = 'u32[144,128]{1,0:T(1,128)}', space=vmem, size = 0x12000, scoped, tag = 'internal scratch']
  %s0 = inlined_call_operand.vmem [shape: s32[2,1], index: 0, kind: input, shape index: {}]
  %s1 = inlined_call_operand.vmem [shape: s32[2,1], index: 1, kind: input, shape index: {}]
  %s2 = inlined_call_operand.hbm [shape: f32[1,8,512], index: 2, kind: input, shape index: {}]
  %s3 = inlined_call_operand.hbm [shape: f32[2,8,512], index: 3, kind: input, shape index: {}]
  %s4 = inlined_call_operand.hbm [shape: f32[2,512], index: 4, kind: output, shape index: {}]
  %s5 = sld [smem:[#allocation0]]
  $region34: #{tpu_custom_call.1} parent=0
    _
  %s7 = ssub.s32 1, %s5
  %s8 = scalar_select 0, %s7, %s5
  $region1: #{tpu_custom_call.1} parent=0
    #allocation2 [shape = 'u8[16384]{0}', space=vmem, size = 0x4000, scoped, tag = 'input window, operand 2, single buffered']
    #allocation3 [shape = 's32[1]{0}', space=sflag, size = 0x4, scoped, tag = 'scoped memory for tpu_custom_call.1']
    #allocation4 [shape = 's32[1]{0}', space=sflag, size = 0x4, scoped, tag = 'scoped memory for tpu_custom_call.1']
    #allocation5 [shape = 'u8[32768]{0}', space=vmem, size = 0x8000, scoped, tag = 'input window, operand 3, single buffered']
    #allocation6 [shape = 's32[1]{0}', space=sflag, size = 0x4, scoped, tag = 'scoped memory for tpu_custom_call.1']
    #allocation7 [shape = 'u8[4096]{0}', space=vmem, size = 0x1000, scoped, tag = 'output window, operand 0, single buffered']
    %9 = vsyncpa [#allocation3], 0
    %10 = vsyncpa [#allocation6], 0
    %11 = vsyncpa [#allocation4], 0
    // Predicated region
    $region2: #{tpu_custom_call.1} parent=1 // pred_check
      _
    $region3: #{tpu_custom_call.1} parent=1 // pred_check_branch
      %13 = sbr.rel (0) target = $region5
    $region4: #{tpu_custom_call.1} parent=1 // pred_region
      _
    $region5: #{tpu_custom_call.1} parent=1 // pred_fallthru
      _
    // Predicated region
    $region6: #{tpu_custom_call.1} parent=1 // pred_check
      _
    $region7: #{tpu_custom_call.1} parent=1 // pred_check_branch
      %15 = sbr.rel (0) target = $region9
    $region8: #{tpu_custom_call.1} parent=1 // pred_region
      _
    $region9: #{tpu_custom_call.1} parent=1 // pred_fallthru
      _
    // Predicated region
    $region10: #{tpu_custom_call.1} parent=1 // pred_check
      _
    $region11: #{tpu_custom_call.1} parent=1 // pred_check_branch
      %17 = sbr.rel (0) target = $region13
    $region12: #{tpu_custom_call.1} parent=1 // pred_region
      %s19 = ssub.s32 512, 512
      %20 = vsyncadd [#allocation3], %s19
      %s22 = sshll.u32 [#allocation2], 4
      %s23 = int_to_ptr.vmem [resolvable:$true] %s22
      %25 = dma.hbm_to_vmem [thread:$0]  %s2, 512, %s23, [#allocation3]
    $region13: #{tpu_custom_call.1} parent=1 // pred_fallthru
      _
    // Predicated region
    $region14: #{tpu_custom_call.1} parent=1 // pred_check
      _
    $region15: #{tpu_custom_call.1} parent=1 // pred_check_branch
      %27 = sbr.rel (0) target = $region17
    $region16: #{tpu_custom_call.1} parent=1 // pred_region
      %s29 = ssub.s32 1024, 1024
      %30 = vsyncadd [#allocation6], %s29
      %s31 = sshll.u32 [#allocation5], 4
      %s32 = int_to_ptr.vmem [resolvable:$true] %s31
      %37 = dma.hbm_to_vmem [thread:$0]  %s3, 1024, %s32, [#allocation6], 512, 512, 32
    $region17: #{tpu_custom_call.1} parent=1 // pred_fallthru
      _
    // Predicated region
    $region18: #{tpu_custom_call.1} parent=1 // pred_check
      _
    $region19: #{tpu_custom_call.1} parent=1 // pred_check_branch
      %39 = sbr.rel (0) target = $region21
    $region20: #{tpu_custom_call.1} parent=1 // pred_region
      %40 = dma.done [#allocation3], 512
    $region21: #{tpu_custom_call.1} parent=1 // pred_fallthru
      _
    // Predicated region
    $region22: #{tpu_custom_call.1} parent=1 // pred_check
      _
    $region23: #{tpu_custom_call.1} parent=1 // pred_check_branch
      %42 = sbr.rel (0) target = $region25
    $region24: #{tpu_custom_call.1} parent=1 // pred_region
      %43 = dma.done [#allocation6], 1024
    $region25: #{tpu_custom_call.1} parent=1 // pred_fallthru
      _
    %v44 = vld [vmem:[#allocation5] sm:$0xff]
    %v45 = vld [vmem:[#allocation5 + $0x8] sm:$0xff]
    %v46 = vld [vmem:[#allocation5 + $0x10] sm:$0xff]
    %v47 = vld [vmem:[#allocation5 + $0x18] sm:$0xff]
    %v48 = vld [vmem:[#allocation5 + $0x20] sm:$0xff]
    %v49 = vld [vmem:[#allocation5 + $0x28] sm:$0xff]
    %v50 = vld [vmem:[#allocation5 + $0x30] sm:$0xff]
    %v51 = vld [vmem:[#allocation5 + $0x38] sm:$0xff]
    %v52 = vrot.slane %v44, 4
    %v53 = vmax.f32 %v44, %v52
    %v54 = vrot.slane %v53, 2
    %v55 = vmax.f32 %v53, %v54
    %v56 = vrot.slane %v55, 1
    %v57 = vmax.f32 %v55, %v56
    %v58 = vrot.slane %v45, 4
    %v59 = vmax.f32 %v45, %v58
    %v60 = vrot.slane %v59, 2
    %v61 = vmax.f32 %v59, %v60
    %v62 = vrot.slane %v61, 1
    %v63 = vmax.f32 %v61, %v62
    %v64 = vrot.slane %v46, 4
    %v65 = vmax.f32 %v46, %v64
    %v66 = vrot.slane %v65, 2
    %v67 = vmax.f32 %v65, %v66
    %v68 = vrot.slane %v67, 1
    %v69 = vmax.f32 %v67, %v68
    %v70 = vrot.slane %v47, 4
    %v71 = vmax.f32 %v47, %v70
    %v72 = vrot.slane %v71, 2
    %v73 = vmax.f32 %v71, %v72
    %v74 = vrot.slane %v73, 1
    %v75 = vmax.f32 %v73, %v74
    %v76 = vrot.slane %v48, 4
    %v77 = vmax.f32 %v48, %v76
    %v78 = vrot.slane %v77, 2
    %v79 = vmax.f32 %v77, %v78
    %v80 = vrot.slane %v79, 1
    %v81 = vmax.f32 %v79, %v80
    %v82 = vrot.slane %v49, 4
    %v83 = vmax.f32 %v49, %v82
    %v84 = vrot.slane %v83, 2
    %v85 = vmax.f32 %v83, %v84
    %v86 = vrot.slane %v85, 1
    %v87 = vmax.f32 %v85, %v86
    %v88 = vrot.slane %v50, 4
    %v89 = vmax.f32 %v50, %v88
    %v90 = vrot.slane %v89, 2
    %v91 = vmax.f32 %v89, %v90
    %v92 = vrot.slane %v91, 1
    %v93 = vmax.f32 %v91, %v92
    %v94 = vrot.slane %v51, 4
    %v95 = vmax.f32 %v51, %v94
    %v96 = vrot.slane %v95, 2
    %v97 = vmax.f32 %v95, %v96
    %v98 = vrot.slane %v97, 1
    %v99 = vmax.f32 %v97, %v98
    %v100 = vsub.f32 %v44, %v57
    %v101 = vsub.f32 %v45, %v63
    %v102 = vsub.f32 %v46, %v69
    %v103 = vsub.f32 %v47, %v75
    %v104 = vsub.f32 %v48, %v81
    %v105 = vsub.f32 %v49, %v87
    %v106 = vsub.f32 %v50, %v93
    %v107 = vsub.f32 %v51, %v99
    %v108 = vmul.f32 %v100, 1.442695
    %v109 = vpow.pop %v108
    %v110 = vmul.f32 %v101, 1.442695
    %v111 = vpow.pop %v110
    %v112 = vmul.f32 %v102, 1.442695
    %v113 = vpow.pop %v112
    %v114 = vmul.f32 %v103, 1.442695
    %v115 = vpow.pop %v114
    %v116 = vmul.f32 %v104, 1.442695
    %v117 = vpow.pop %v116
    %v118 = vmul.f32 %v105, 1.442695
    %v119 = vpow.pop %v118
    %v120 = vmul.f32 %v106, 1.442695
    %v121 = vpow.pop %v120
    %v122 = vmul.f32 %v107, 1.442695
    %v123 = vpow.pop %v122
    %v124 = vrot.slane %v109, 4
    %v125 = vadd.f32 %v109, %v124
    %v126 = vrot.slane %v125, 2
    %v127 = vadd.f32 %v125, %v126
    %v128 = vrot.slane %v127, 1
    %v129 = vadd.f32 %v127, %v128
    %v130 = vrot.slane %v111, 4
    %v131 = vadd.f32 %v111, %v130
    %v132 = vrot.slane %v131, 2
    %v133 = vadd.f32 %v131, %v132
    %v134 = vrot.slane %v133, 1
    %v135 = vadd.f32 %v133, %v134
    %v136 = vrot.slane %v113, 4
    %v137 = vadd.f32 %v113, %v136
    %v138 = vrot.slane %v137, 2
    %v139 = vadd.f32 %v137, %v138
    %v140 = vrot.slane %v139, 1
    %v141 = vadd.f32 %v139, %v140
    %v142 = vrot.slane %v115, 4
    %v143 = vadd.f32 %v115, %v142
    %v144 = vrot.slane %v143, 2
    %v145 = vadd.f32 %v143, %v144
    %v146 = vrot.slane %v145, 1
    %v147 = vadd.f32 %v145, %v146
    %v148 = vrot.slane %v117, 4
    %v149 = vadd.f32 %v117, %v148
    %v150 = vrot.slane %v149, 2
    %v151 = vadd.f32 %v149, %v150
    %v152 = vrot.slane %v151, 1
    %v153 = vadd.f32 %v151, %v152
    %v154 = vrot.slane %v119, 4
    %v155 = vadd.f32 %v119, %v154
    %v156 = vrot.slane %v155, 2
    %v157 = vadd.f32 %v155, %v156
    %v158 = vrot.slane %v157, 1
    %v159 = vadd.f32 %v157, %v158
    %v160 = vrot.slane %v121, 4
    %v161 = vadd.f32 %v121, %v160
    %v162 = vrot.slane %v161, 2
    %v163 = vadd.f32 %v161, %v162
    %v164 = vrot.slane %v163, 1
    %v165 = vadd.f32 %v163, %v164
    %v166 = vrot.slane %v123, 4
    %v167 = vadd.f32 %v123, %v166
    %v168 = vrot.slane %v167, 2
    %v169 = vadd.f32 %v167, %v168
    %v170 = vrot.slane %v169, 1
    %v171 = vadd.f32 %v169, %v170
    %v172 = vrcp.pop %v129
    %v173 = vmul.f32 %v109, %v172
    %v174 = vrcp.pop %v135
    %v175 = vmul.f32 %v111, %v174
    %v176 = vrcp.pop %v141
    %v177 = vmul.f32 %v113, %v176
    %v178 = vrcp.pop %v147
    %v179 = vmul.f32 %v115, %v178
    %v180 = vrcp.pop %v153
    %v181 = vmul.f32 %v117, %v180
    %v182 = vrcp.pop %v159
    %v183 = vmul.f32 %v119, %v182
    %v184 = vrcp.pop %v165
    %v185 = vmul.f32 %v121, %v184
    %v186 = vrcp.pop %v171
    %v187 = vmul.f32 %v123, %v186
    %v188 = vld [vmem:[#allocation2] sm:$0xff]
    %v189 = vld [vmem:[#allocation2 + $0x8] sm:$0xff]
    %v190 = vld [vmem:[#allocation2 + $0x10] sm:$0xff]
    %v191 = vld [vmem:[#allocation2 + $0x18] sm:$0xff]
    %v192 = vmul.f32 %v173, %v188
    %v193 = vmul.f32 %v175, %v189
    %v194 = vmul.f32 %v177, %v190
    %v195 = vmul.f32 %v179, %v191
    %v196 = vmul.f32 %v181, %v188
    %v197 = vmul.f32 %v183, %v189
    %v198 = vmul.f32 %v185, %v190
    %v199 = vmul.f32 %v187, %v191
    %v200 = vlaneseq
    %v201 = vand.u32 %v200, 127
    %v202 = vadd.s32 %v201, 128
    %v203 = vadd.s32 %v201, 256
    %v204 = vadd.s32 %v201, 384
    %v205 = vld [vmem:[%s0] sm:$0x3]
    %206 = vset.pattern.permute.xlu0 0
    %207 = vperm.xlu0 %206, %v205
    %v208 = vpop.permute.xlu0 %207
    %vm209 = vcmp.eq.s32.totalorder %v201, %v208
    %vm210 = vcmp.eq.s32.totalorder %v202, %v208
    %vm211 = vcmp.eq.s32.totalorder %v203, %v208
    %vm212 = vcmp.eq.s32.totalorder %v204, %v208
    %v213 = vsel %vm209, 1, 0
    %v214 = vsel %vm210, 1, 0
    %v215 = vsel %vm211, 1, 0
    %v216 = vsel %vm212, 1, 0
    %v217 = vcvt.s32.f32 %v213
    %v218 = vcvt.s32.f32 %v214
    %v219 = vcvt.s32.f32 %v215
    %v220 = vcvt.s32.f32 %v216
    %v221 = vld [vmem:[%s1] sm:$0x3]
    %222 = vset.pattern.permute.xlu0 0
    %223 = vperm.xlu0 %222, %v221
    %v224 = vpop.permute.xlu0 %223
    %vm225 = vcmp.eq.s32.totalorder %v201, %v224
    %vm226 = vcmp.eq.s32.totalorder %v202, %v224
    %vm227 = vcmp.eq.s32.totalorder %v203, %v224
    %vm228 = vcmp.eq.s32.totalorder %v204, %v224
    %v229 = vsel %vm225, 1, 0
    %v230 = vsel %vm226, 1, 0
    %v231 = vsel %vm227, 1, 0
    %v232 = vsel %vm228, 1, 0
    %v233 = vcvt.s32.f32 %v229
    %v234 = vcvt.s32.f32 %v230
    %v235 = vcvt.s32.f32 %v231
    %v236 = vcvt.s32.f32 %v232
    %v237 = vsub.f32 1.0, %v233
    %v238 = vsub.f32 1.0, %v234
    %v239 = vsub.f32 1.0, %v235
    %v240 = vsub.f32 1.0, %v236
    %v241 = vmul.f32 %v217, %v237
    %v242 = vmul.f32 %v218, %v238
    %v243 = vmul.f32 %v219, %v239
    %v244 = vmul.f32 %v220, %v240
    %v245 = vadd.f32 %v241, 0.0
    %v246 = vadd.f32 %v242, 0.0
    %v247 = vadd.f32 %v243, 0.0
    %v248 = vadd.f32 %v244, 0.0
    %v253 = vcombine.low %v241, %v242
    %v254 = vcombine.low %v243, %v244
    %v256 = vunpack.c.l.s4 1966171168
    %v257 = vunpack.c.0.s8 %v256
    %v258 = vlaneseq
    %v259 = vshrl.u32 %v258, 7
    %v260 = vsub.s32 %v257, %v259
    %v261 = vrot.slane %v253, %v260
    %v263 = vunpack.c.l.s4 1966171168
    %v264 = vunpack.c.0.s8 %v263
    %v265 = vlaneseq
    %v266 = vshrl.u32 %v265, 7
    %v267 = vsub.s32 %v264, %v266
    %v268 = vrot.slane %v254, %v267
    %v269 = vcombine.low %v261, %v268
    %v270 = vcombine.high %v261, %v268
    %v272 = vunpack.c.l.s4 1966171168
    %v273 = vunpack.c.0.s8 %v272
    %v274 = vlaneseq
    %v275 = vshrl.u32 %v274, 7
    %v276 = vsub.s32 %v273, %v275
    %v277 = vrot.slane %v269, %v276
    %v279 = vunpack.c.l.s4 1966171168
    %v280 = vunpack.c.0.s8 %v279
    %v281 = vlaneseq
    %v282 = vshrl.u32 %v281, 7
    %v283 = vsub.s32 %v280, %v282
    %v284 = vrot.slane %v270, %v283
    %v285 = vlaneseq
    %v286 = vshrl.u32 %v285, 7
    %v287 = vsub.s32 0, %v286
    %v288 = vrot.slane %v277, %v287
    %v289 = vlaneseq
    %v290 = vshrl.u32 %v289, 7
    %v291 = vsub.s32 1, %v290
    %v292 = vrot.slane %v277, %v291
    %v293 = vlaneseq
    %v294 = vshrl.u32 %v293, 7
    %v295 = vsub.s32 2, %v294
    %v296 = vrot.slane %v277, %v295
    %v297 = vlaneseq
    %v298 = vshrl.u32 %v297, 7
    %v299 = vsub.s32 3, %v298
    %v300 = vrot.slane %v277, %v299
    %v301 = vlaneseq
    %v302 = vshrl.u32 %v301, 7
    %v303 = vsub.s32 0, %v302
    %v304 = vrot.slane %v284, %v303
    %v305 = vlaneseq
    %v306 = vshrl.u32 %v305, 7
    %v307 = vsub.s32 1, %v306
    %v308 = vrot.slane %v284, %v307
    %v309 = vlaneseq
    %v310 = vshrl.u32 %v309, 7
    %v311 = vsub.s32 2, %v310
    %v312 = vrot.slane %v284, %v311
    %v313 = vlaneseq
    %v314 = vshrl.u32 %v313, 7
    %v315 = vsub.s32 3, %v314
    %v316 = vrot.slane %v284, %v315
    %v325 = vmul.f32 %v192, %v288
    %v326 = vmul.f32 %v193, %v292
    %v327 = vmul.f32 %v194, %v296
    %v328 = vmul.f32 %v195, %v300
    %v329 = vmul.f32 %v196, %v304
    %v330 = vmul.f32 %v197, %v308
    %v331 = vmul.f32 %v198, %v312
    %v332 = vmul.f32 %v199, %v316
    %v341 = vrot.slane %v329, 7
    %vm342 = vcmask 1041409
    %v343 = vsel %vm342, %v341, %v325
    %v344 = vrot.slane %v330, 7
    %v345 = vsel %vm342, %v344, %v326
    %v346 = vrot.slane %v331, 7
    %v347 = vsel %vm342, %v346, %v327
    %v348 = vrot.slane %v332, 7
    %v349 = vsel %vm342, %v348, %v328
    %354 = vrot.lane.b32.xlu0 %v343, 95
    %v355 = vpop.permute.xlu0 %354
    %356 = vrot.lane.b32.xlu0 %v345, 95
    %v357 = vpop.permute.xlu0 %356
    %358 = vrot.lane.b32.xlu0 %v347, 95
    %v359 = vpop.permute.xlu0 %358
    %360 = vrot.lane.b32.xlu0 %v349, 95
    %v361 = vpop.permute.xlu0 %360
    %vm362 = vcmp.lt.s32.totalorder %v201, 95
    %v363 = vsel %vm362, %v359, %v361
    %v364 = vsel %vm362, %v357, %v359
    %v365 = vsel %vm362, %v355, %v357
    %v366 = vsel %vm362, %v361, %v355
    %v367 = vadd.f32 %v365, 0.0
    %v368 = vadd.f32 %v364, 0.0
    %v369 = vadd.f32 %v363, 0.0
    %v370 = vadd.f32 %v366, 0.0
    %v371 = vrot.slane %v325, 1
    %v372 = vsel %vm342, %v329, %v371
    %v373 = vrot.slane %v326, 1
    %v374 = vsel %vm342, %v330, %v373
    %v375 = vrot.slane %v327, 1
    %v376 = vsel %vm342, %v331, %v375
    %v377 = vrot.slane %v328, 1
    %v378 = vsel %vm342, %v332, %v377
    %383 = vrot.lane.b32.xlu0 %v372, 96
    %v384 = vpop.permute.xlu0 %383
    %385 = vrot.lane.b32.xlu0 %v374, 96
    %v386 = vpop.permute.xlu0 %385
    %387 = vrot.lane.b32.xlu0 %v376, 96
    %v388 = vpop.permute.xlu0 %387
    %389 = vrot.lane.b32.xlu0 %v378, 96
    %v390 = vpop.permute.xlu0 %389
    %vm391 = vcmp.lt.s32.totalorder %v201, 96
    %v392 = vsel %vm391, %v388, %v390
    %v393 = vsel %vm391, %v386, %v388
    %v394 = vsel %vm391, %v384, %v386
    %v395 = vsel %vm391, %v390, %v384
    %v396 = vadd.f32 %v367, %v394
    %v397 = vadd.f32 %v368, %v393
    %v398 = vadd.f32 %v369, %v392
    %v399 = vadd.f32 %v370, %v395
    %v400 = vrot.slane %v325, 2
    %v401 = vrot.slane %v329, 1
    %v402 = vsel %vm342, %v401, %v400
    %v403 = vrot.slane %v326, 2
    %v404 = vrot.slane %v330, 1
    %v405 = vsel %vm342, %v404, %v403
    %v406 = vrot.slane %v327, 2
    %v407 = vrot.slane %v331, 1
    %v408 = vsel %vm342, %v407, %v406
    %v409 = vrot.slane %v328, 2
    %v410 = vrot.slane %v332, 1
    %v411 = vsel %vm342, %v410, %v409
    %416 = vrot.lane.b32.xlu0 %v402, 97
    %v417 = vpop.permute.xlu0 %416
    %418 = vrot.lane.b32.xlu0 %v405, 97
    %v419 = vpop.permute.xlu0 %418
    %420 = vrot.lane.b32.xlu0 %v408, 97
    %v421 = vpop.permute.xlu0 %420
    %422 = vrot.lane.b32.xlu0 %v411, 97
    %v423 = vpop.permute.xlu0 %422
    %vm424 = vcmp.lt.s32.totalorder %v201, 97
    %v425 = vsel %vm424, %v421, %v423
    %v426 = vsel %vm424, %v419, %v421
    %v427 = vsel %vm424, %v417, %v419
    %v428 = vsel %vm424, %v423, %v417
    %v429 = vadd.f32 %v396, %v427
    %v430 = vadd.f32 %v397, %v426
    %v431 = vadd.f32 %v398, %v425
    %v432 = vadd.f32 %v399, %v428
    %v433 = vrot.slane %v325, 3
    %v434 = vrot.slane %v329, 2
    %v435 = vsel %vm342, %v434, %v433
    %v436 = vrot.slane %v326, 3
    %v437 = vrot.slane %v330, 2
    %v438 = vsel %vm342, %v437, %v436
    %v439 = vrot.slane %v327, 3
    %v440 = vrot.slane %v331, 2
    %v441 = vsel %vm342, %v440, %v439
    %v442 = vrot.slane %v328, 3
    %v443 = vrot.slane %v332, 2
    %v444 = vsel %vm342, %v443, %v442
    %449 = vrot.lane.b32.xlu0 %v435, 127
    %v450 = vpop.permute.xlu0 %449
    %451 = vrot.lane.b32.xlu0 %v438, 127
    %v452 = vpop.permute.xlu0 %451
    %453 = vrot.lane.b32.xlu0 %v441, 127
    %v454 = vpop.permute.xlu0 %453
    %455 = vrot.lane.b32.xlu0 %v444, 127
    %v456 = vpop.permute.xlu0 %455
    %vm457 = vcmp.lt.s32.totalorder %v201, 127
    %v458 = vsel %vm457, %v454, %v456
    %v459 = vsel %vm457, %v452, %v454
    %v460 = vsel %vm457, %v450, %v452
    %v461 = vsel %vm457, %v456, %v450
    %v462 = vadd.f32 %v429, %v460
    %v463 = vadd.f32 %v430, %v459
    %v464 = vadd.f32 %v431, %v458
    %v465 = vadd.f32 %v432, %v461
    %v466 = vrot.slane %v325, 4
    %v467 = vrot.slane %v329, 3
    %v468 = vsel %vm342, %v467, %v466
    %v469 = vrot.slane %v326, 4
    %v470 = vrot.slane %v330, 3
    %v471 = vsel %vm342, %v470, %v469
    %v472 = vrot.slane %v327, 4
    %v473 = vrot.slane %v331, 3
    %v474 = vsel %vm342, %v473, %v472
    %v475 = vrot.slane %v328, 4
    %v476 = vrot.slane %v332, 3
    %v477 = vsel %vm342, %v476, %v475
    %482 = vrot.lane.b32.xlu0 %v468, 1
    %v483 = vpop.permute.xlu0 %482
    %484 = vrot.lane.b32.xlu0 %v471, 1
    %v485 = vpop.permute.xlu0 %484
    %486 = vrot.lane.b32.xlu0 %v474, 1
    %v487 = vpop.permute.xlu0 %486
    %488 = vrot.lane.b32.xlu0 %v477, 1
    %v489 = vpop.permute.xlu0 %488
    %vm490 = vcmp.lt.s32.totalorder %v201, 1
    %v491 = vsel %vm490, %v487, %v489
    %v492 = vsel %vm490, %v485, %v487
    %v493 = vsel %vm490, %v483, %v485
    %v494 = vsel %vm490, %v489, %v483
    %v495 = vadd.f32 %v462, %v494
    %v496 = vadd.f32 %v463, %v493
    %v497 = vadd.f32 %v464, %v492
    %v498 = vadd.f32 %v465, %v491
    %v499 = vrot.slane %v325, 5
    %v500 = vrot.slane %v329, 4
    %v501 = vsel %vm342, %v500, %v499
    %v502 = vrot.slane %v326, 5
    %v503 = vrot.slane %v330, 4
    %v504 = vsel %vm342, %v503, %v502
    %v505 = vrot.slane %v327, 5
    %v506 = vrot.slane %v331, 4
    %v507 = vsel %vm342, %v506, %v505
    %v508 = vrot.slane %v328, 5
    %v509 = vrot.slane %v332, 4
    %v510 = vsel %vm342, %v509, %v508
    %515 = vrot.lane.b32.xlu0 %v501, 31
    %v516 = vpop.permute.xlu0 %515
    %517 = vrot.lane.b32.xlu0 %v504, 31
    %v518 = vpop.permute.xlu0 %517
    %519 = vrot.lane.b32.xlu0 %v507, 31
    %v520 = vpop.permute.xlu0 %519
    %521 = vrot.lane.b32.xlu0 %v510, 31
    %v522 = vpop.permute.xlu0 %521
    %vm523 = vcmp.lt.s32.totalorder %v201, 31
    %v524 = vsel %vm523, %v520, %v522
    %v525 = vsel %vm523, %v518, %v520
    %v526 = vsel %vm523, %v516, %v518
    %v527 = vsel %vm523, %v522, %v516
    %v528 = vadd.f32 %v495, %v527
    %v529 = vadd.f32 %v496, %v526
    %v530 = vadd.f32 %v497, %v525
    %v531 = vadd.f32 %v498, %v524
    %v532 = vrot.slane %v325, 6
    %v533 = vrot.slane %v329, 5
    %v534 = vsel %vm342, %v533, %v532
    %v535 = vrot.slane %v326, 6
    %v536 = vrot.slane %v330, 5
    %v537 = vsel %vm342, %v536, %v535
    %v538 = vrot.slane %v327, 6
    %v539 = vrot.slane %v331, 5
    %v540 = vsel %vm342, %v539, %v538
    %v541 = vrot.slane %v328, 6
    %v542 = vrot.slane %v332, 5
    %v543 = vsel %vm342, %v542, %v541
    %548 = vrot.lane.b32.xlu0 %v534, 32
    %v549 = vpop.permute.xlu0 %548
    %550 = vrot.lane.b32.xlu0 %v537, 32
    %v551 = vpop.permute.xlu0 %550
    %552 = vrot.lane.b32.xlu0 %v540, 32
    %v553 = vpop.permute.xlu0 %552
    %554 = vrot.lane.b32.xlu0 %v543, 32
    %v555 = vpop.permute.xlu0 %554
    %vm556 = vcmp.lt.s32.totalorder %v201, 32
    %v557 = vsel %vm556, %v553, %v555
    %v558 = vsel %vm556, %v551, %v553
    %v559 = vsel %vm556, %v549, %v551
    %v560 = vsel %vm556, %v555, %v549
    %v561 = vadd.f32 %v528, %v560
    %v562 = vadd.f32 %v529, %v559
    %v563 = vadd.f32 %v530, %v558
    %v564 = vadd.f32 %v531, %v557
    %v565 = vrot.slane %v325, 7
    %v566 = vrot.slane %v329, 6
    %v567 = vsel %vm342, %v566, %v565
    %v568 = vrot.slane %v326, 7
    %v569 = vrot.slane %v330, 6
    %v570 = vsel %vm342, %v569, %v568
    %v571 = vrot.slane %v327, 7
    %v572 = vrot.slane %v331, 6
    %v573 = vsel %vm342, %v572, %v571
    %v574 = vrot.slane %v328, 7
    %v575 = vrot.slane %v332, 6
    %v576 = vsel %vm342, %v575, %v574
    %581 = vrot.lane.b32.xlu0 %v567, 33
    %v582 = vpop.permute.xlu0 %581
    %583 = vrot.lane.b32.xlu0 %v570, 33
    %v584 = vpop.permute.xlu0 %583
    %585 = vrot.lane.b32.xlu0 %v573, 33
    %v586 = vpop.permute.xlu0 %585
    %587 = vrot.lane.b32.xlu0 %v576, 33
    %v588 = vpop.permute.xlu0 %587
    %vm589 = vcmp.lt.s32.totalorder %v201, 33
    %v590 = vsel %vm589, %v586, %v588
    %v591 = vsel %vm589, %v584, %v586
    %v592 = vsel %vm589, %v582, %v584
    %v593 = vsel %vm589, %v588, %v582
    %v594 = vadd.f32 %v561, %v593
    %v595 = vadd.f32 %v562, %v592
    %v596 = vadd.f32 %v563, %v591
    %v597 = vadd.f32 %v564, %v590
    %v598 = vmul.f32 %v594, %v237
    %v599 = vmul.f32 %v595, %v238
    %v600 = vmul.f32 %v596, %v239
    %v601 = vmul.f32 %v597, %v240
    %v602 = vadd.f32 %v245, %v598
    %v603 = vadd.f32 %v246, %v599
    %v604 = vadd.f32 %v247, %v600
    %v605 = vadd.f32 %v248, %v601
    %v610 = vcombine.low %v598, %v599
    %v611 = vcombine.low %v600, %v601
    %v613 = vunpack.c.l.s4 1966171168
    %v614 = vunpack.c.0.s8 %v613
    %v615 = vlaneseq
    %v616 = vshrl.u32 %v615, 7
    %v617 = vsub.s32 %v614, %v616
    %v618 = vrot.slane %v610, %v617
    %v620 = vunpack.c.l.s4 1966171168
    %v621 = vunpack.c.0.s8 %v620
    %v622 = vlaneseq
    %v623 = vshrl.u32 %v622, 7
    %v624 = vsub.s32 %v621, %v623
    %v625 = vrot.slane %v611, %v624
    %v626 = vcombine.low %v618, %v625
    %v627 = vcombine.high %v618, %v625
    %v629 = vunpack.c.l.s4 1966171168
    %v630 = vunpack.c.0.s8 %v629
    %v631 = vlaneseq
    %v632 = vshrl.u32 %v631, 7
    %v633 = vsub.s32 %v630, %v632
    %v634 = vrot.slane %v626, %v633
    %v636 = vunpack.c.l.s4 1966171168
    %v637 = vunpack.c.0.s8 %v636
    %v638 = vlaneseq
    %v639 = vshrl.u32 %v638, 7
    %v640 = vsub.s32 %v637, %v639
    %v641 = vrot.slane %v627, %v640
    %v642 = vlaneseq
    %v643 = vshrl.u32 %v642, 7
    %v644 = vsub.s32 0, %v643
    %v645 = vrot.slane %v634, %v644
    %v646 = vlaneseq
    %v647 = vshrl.u32 %v646, 7
    %v648 = vsub.s32 1, %v647
    %v649 = vrot.slane %v634, %v648
    %v650 = vlaneseq
    %v651 = vshrl.u32 %v650, 7
    %v652 = vsub.s32 2, %v651
    %v653 = vrot.slane %v634, %v652
    %v654 = vlaneseq
    %v655 = vshrl.u32 %v654, 7
    %v656 = vsub.s32 3, %v655
    %v657 = vrot.slane %v634, %v656
    %v658 = vlaneseq
    %v659 = vshrl.u32 %v658, 7
    %v660 = vsub.s32 0, %v659
    %v661 = vrot.slane %v641, %v660
    %v662 = vlaneseq
    %v663 = vshrl.u32 %v662, 7
    %v664 = vsub.s32 1, %v663
    %v665 = vrot.slane %v641, %v664
    %v666 = vlaneseq
    %v667 = vshrl.u32 %v666, 7
    %v668 = vsub.s32 2, %v667
    %v669 = vrot.slane %v641, %v668
    %v670 = vlaneseq
    %v671 = vshrl.u32 %v670, 7
    %v672 = vsub.s32 3, %v671
    %v673 = vrot.slane %v641, %v672
    %v682 = vmul.f32 %v192, %v645
    %v683 = vmul.f32 %v193, %v649
    %v684 = vmul.f32 %v194, %v653
    %v685 = vmul.f32 %v195, %v657
    %v686 = vmul.f32 %v196, %v661
    %v687 = vmul.f32 %v197, %v665
    %v688 = vmul.f32 %v198, %v669
    %v689 = vmul.f32 %v199, %v673
    %v698 = vrot.slane %v686, 7
    %v699 = vsel %vm342, %v698, %v682
    %v700 = vrot.slane %v687, 7
    %v701 = vsel %vm342, %v700, %v683
    %v702 = vrot.slane %v688, 7
    %v703 = vsel %vm342, %v702, %v684
    %v704 = vrot.slane %v689, 7
    %v705 = vsel %vm342, %v704, %v685
    %710 = vrot.lane.b32.xlu0 %v699, 95
    %v711 = vpop.permute.xlu0 %710
    %712 = vrot.lane.b32.xlu0 %v701, 95
    %v713 = vpop.permute.xlu0 %712
    %714 = vrot.lane.b32.xlu0 %v703, 95
    %v715 = vpop.permute.xlu0 %714
    %716 = vrot.lane.b32.xlu0 %v705, 95
    %v717 = vpop.permute.xlu0 %716
    %v718 = vsel %vm362, %v715, %v717
    %v719 = vsel %vm362, %v713, %v715
    %v720 = vsel %vm362, %v711, %v713
    %v721 = vsel %vm362, %v717, %v711
    %v722 = vadd.f32 %v720, 0.0
    %v723 = vadd.f32 %v719, 0.0
    %v724 = vadd.f32 %v718, 0.0
    %v725 = vadd.f32 %v721, 0.0
    %v726 = vrot.slane %v682, 1
    %v727 = vsel %vm342, %v686, %v726
    %v728 = vrot.slane %v683, 1
    %v729 = vsel %vm342, %v687, %v728
    %v730 = vrot.slane %v684, 1
    %v731 = vsel %vm342, %v688, %v730
    %v732 = vrot.slane %v685, 1
    %v733 = vsel %vm342, %v689, %v732
    %738 = vrot.lane.b32.xlu0 %v727, 96
    %v739 = vpop.permute.xlu0 %738
    %740 = vrot.lane.b32.xlu0 %v729, 96
    %v741 = vpop.permute.xlu0 %740
    %742 = vrot.lane.b32.xlu0 %v731, 96
    %v743 = vpop.permute.xlu0 %742
    %744 = vrot.lane.b32.xlu0 %v733, 96
    %v745 = vpop.permute.xlu0 %744
    %v746 = vsel %vm391, %v743, %v745
    %v747 = vsel %vm391, %v741, %v743
    %v748 = vsel %vm391, %v739, %v741
    %v749 = vsel %vm391, %v745, %v739
    %v750 = vadd.f32 %v722, %v748
    %v751 = vadd.f32 %v723, %v747
    %v752 = vadd.f32 %v724, %v746
    %v753 = vadd.f32 %v725, %v749
    %v754 = vrot.slane %v682, 2
    %v755 = vrot.slane %v686, 1
    %v756 = vsel %vm342, %v755, %v754
    %v757 = vrot.slane %v683, 2
    %v758 = vrot.slane %v687, 1
    %v759 = vsel %vm342, %v758, %v757
    %v760 = vrot.slane %v684, 2
    %v761 = vrot.slane %v688, 1
    %v762 = vsel %vm342, %v761, %v760
    %v763 = vrot.slane %v685, 2
    %v764 = vrot.slane %v689, 1
    %v765 = vsel %vm342, %v764, %v763
    %770 = vrot.lane.b32.xlu0 %v756, 97
    %v771 = vpop.permute.xlu0 %770
    %772 = vrot.lane.b32.xlu0 %v759, 97
    %v773 = vpop.permute.xlu0 %772
    %774 = vrot.lane.b32.xlu0 %v762, 97
    %v775 = vpop.permute.xlu0 %774
    %776 = vrot.lane.b32.xlu0 %v765, 97
    %v777 = vpop.permute.xlu0 %776
    %v778 = vsel %vm424, %v775, %v777
    %v779 = vsel %vm424, %v773, %v775
    %v780 = vsel %vm424, %v771, %v773
    %v781 = vsel %vm424, %v777, %v771
    %v782 = vadd.f32 %v750, %v780
    %v783 = vadd.f32 %v751, %v779
    %v784 = vadd.f32 %v752, %v778
    %v785 = vadd.f32 %v753, %v781
    %v786 = vrot.slane %v682, 3
    %v787 = vrot.slane %v686, 2
    %v788 = vsel %vm342, %v787, %v786
    %v789 = vrot.slane %v683, 3
    %v790 = vrot.slane %v687, 2
    %v791 = vsel %vm342, %v790, %v789
    %v792 = vrot.slane %v684, 3
    %v793 = vrot.slane %v688, 2
    %v794 = vsel %vm342, %v793, %v792
    %v795 = vrot.slane %v685, 3
    %v796 = vrot.slane %v689, 2
    %v797 = vsel %vm342, %v796, %v795
    %802 = vrot.lane.b32.xlu0 %v788, 127
    %v803 = vpop.permute.xlu0 %802
    %804 = vrot.lane.b32.xlu0 %v791, 127
    %v805 = vpop.permute.xlu0 %804
    %806 = vrot.lane.b32.xlu0 %v794, 127
    %v807 = vpop.permute.xlu0 %806
    %808 = vrot.lane.b32.xlu0 %v797, 127
    %v809 = vpop.permute.xlu0 %808
    %v810 = vsel %vm457, %v807, %v809
    %v811 = vsel %vm457, %v805, %v807
    %v812 = vsel %vm457, %v803, %v805
    %v813 = vsel %vm457, %v809, %v803
    %v814 = vadd.f32 %v782, %v812
    %v815 = vadd.f32 %v783, %v811
    %v816 = vadd.f32 %v784, %v810
    %v817 = vadd.f32 %v785, %v813
    %v818 = vrot.slane %v682, 4
    %v819 = vrot.slane %v686, 3
    %v820 = vsel %vm342, %v819, %v818
    %v821 = vrot.slane %v683, 4
    %v822 = vrot.slane %v687, 3
    %v823 = vsel %vm342, %v822, %v821
    %v824 = vrot.slane %v684, 4
    %v825 = vrot.slane %v688, 3
    %v826 = vsel %vm342, %v825, %v824
    %v827 = vrot.slane %v685, 4
    %v828 = vrot.slane %v689, 3
    %v829 = vsel %vm342, %v828, %v827
    %834 = vrot.lane.b32.xlu0 %v820, 1
    %v835 = vpop.permute.xlu0 %834
    %836 = vrot.lane.b32.xlu0 %v823, 1
    %v837 = vpop.permute.xlu0 %836
    %838 = vrot.lane.b32.xlu0 %v826, 1
    %v839 = vpop.permute.xlu0 %838
    %840 = vrot.lane.b32.xlu0 %v829, 1
    %v841 = vpop.permute.xlu0 %840
    %v842 = vsel %vm490, %v839, %v841
    %v843 = vsel %vm490, %v837, %v839
    %v844 = vsel %vm490, %v835, %v837
    %v845 = vsel %vm490, %v841, %v835
    %v846 = vadd.f32 %v814, %v845
    %v847 = vadd.f32 %v815, %v844
    %v848 = vadd.f32 %v816, %v843
    %v849 = vadd.f32 %v817, %v842
    %v850 = vrot.slane %v682, 5
    %v851 = vrot.slane %v686, 4
    %v852 = vsel %vm342, %v851, %v850
    %v853 = vrot.slane %v683, 5
    %v854 = vrot.slane %v687, 4
    %v855 = vsel %vm342, %v854, %v853
    %v856 = vrot.slane %v684, 5
    %v857 = vrot.slane %v688, 4
    %v858 = vsel %vm342, %v857, %v856
    %v859 = vrot.slane %v685, 5
    %v860 = vrot.slane %v689, 4
    %v861 = vsel %vm342, %v860, %v859
    %866 = vrot.lane.b32.xlu0 %v852, 31
    %v867 = vpop.permute.xlu0 %866
    %868 = vrot.lane.b32.xlu0 %v855, 31
    %v869 = vpop.permute.xlu0 %868
    %870 = vrot.lane.b32.xlu0 %v858, 31
    %v871 = vpop.permute.xlu0 %870
    %872 = vrot.lane.b32.xlu0 %v861, 31
    %v873 = vpop.permute.xlu0 %872
    %v874 = vsel %vm523, %v871, %v873
    %v875 = vsel %vm523, %v869, %v871
    %v876 = vsel %vm523, %v867, %v869
    %v877 = vsel %vm523, %v873, %v867
    %v878 = vadd.f32 %v846, %v877
    %v879 = vadd.f32 %v847, %v876
    %v880 = vadd.f32 %v848, %v875
    %v881 = vadd.f32 %v849, %v874
    %v882 = vrot.slane %v682, 6
    %v883 = vrot.slane %v686, 5
    %v884 = vsel %vm342, %v883, %v882
    %v885 = vrot.slane %v683, 6
    %v886 = vrot.slane %v687, 5
    %v887 = vsel %vm342, %v886, %v885
    %v888 = vrot.slane %v684, 6
    %v889 = vrot.slane %v688, 5
    %v890 = vsel %vm342, %v889, %v888
    %v891 = vrot.slane %v685, 6
    %v892 = vrot.slane %v689, 5
    %v893 = vsel %vm342, %v892, %v891
    %898 = vrot.lane.b32.xlu0 %v884, 32
    %v899 = vpop.permute.xlu0 %898
    %900 = vrot.lane.b32.xlu0 %v887, 32
    %v901 = vpop.permute.xlu0 %900
    %902 = vrot.lane.b32.xlu0 %v890, 32
    %v903 = vpop.permute.xlu0 %902
    %904 = vrot.lane.b32.xlu0 %v893, 32
    %v905 = vpop.permute.xlu0 %904
    %v906 = vsel %vm556, %v903, %v905
    %v907 = vsel %vm556, %v901, %v903
    %v908 = vsel %vm556, %v899, %v901
    %v909 = vsel %vm556, %v905, %v899
    %v910 = vadd.f32 %v878, %v909
    %v911 = vadd.f32 %v879, %v908
    %v912 = vadd.f32 %v880, %v907
    %v913 = vadd.f32 %v881, %v906
    %v914 = vrot.slane %v682, 7
    %v915 = vrot.slane %v686, 6
    %v916 = vsel %vm342, %v915, %v914
    %v917 = vrot.slane %v683, 7
    %v918 = vrot.slane %v687, 6
    %v919 = vsel %vm342, %v918, %v917
    %v920 = vrot.slane %v684, 7
    %v921 = vrot.slane %v688, 6
    %v922 = vsel %vm342, %v921, %v920
    %v923 = vrot.slane %v685, 7
    %v924 = vrot.slane %v689, 6
    %v925 = vsel %vm342, %v924, %v923
    %930 = vrot.lane.b32.xlu0 %v916, 33
    %v931 = vpop.permute.xlu0 %930
    %932 = vrot.lane.b32.xlu0 %v919, 33
    %v933 = vpop.permute.xlu0 %932
    %934 = vrot.lane.b32.xlu0 %v922, 33
    %v935 = vpop.permute.xlu0 %934
    %936 = vrot.lane.b32.xlu0 %v925, 33
    %v937 = vpop.permute.xlu0 %936
    %v938 = vsel %vm589, %v935, %v937
    %v939 = vsel %vm589, %v933, %v935
    %v940 = vsel %vm589, %v931, %v933
    %v941 = vsel %vm589, %v937, %v931
    %v942 = vadd.f32 %v910, %v941
    %v943 = vadd.f32 %v911, %v940
    %v944 = vadd.f32 %v912, %v939
    %v945 = vadd.f32 %v913, %v938
    %v946 = vmul.f32 %v942, %v237
    %v947 = vmul.f32 %v943, %v238
    %v948 = vmul.f32 %v944, %v239
    %v949 = vmul.f32 %v945, %v240
    %v950 = vadd.f32 %v602, %v946
    %v951 = vadd.f32 %v603, %v947
    %v952 = vadd.f32 %v604, %v948
    %v953 = vadd.f32 %v605, %v949
    %v958 = vcombine.low %v946, %v947
    %v959 = vcombine.low %v948, %v949
    %v961 = vunpack.c.l.s4 1966171168
    %v962 = vunpack.c.0.s8 %v961
    %v963 = vlaneseq
    %v964 = vshrl.u32 %v963, 7
    %v965 = vsub.s32 %v962, %v964
    %v966 = vrot.slane %v958, %v965
    %v968 = vunpack.c.l.s4 1966171168
    %v969 = vunpack.c.0.s8 %v968
    %v970 = vlaneseq
    %v971 = vshrl.u32 %v970, 7
    %v972 = vsub.s32 %v969, %v971
    %v973 = vrot.slane %v959, %v972
    %v974 = vcombine.low %v966, %v973
    %v975 = vcombine.high %v966, %v973
    %v977 = vunpack.c.l.s4 1966171168
    %v978 = vunpack.c.0.s8 %v977
    %v979 = vlaneseq
    %v980 = vshrl.u32 %v979, 7
    %v981 = vsub.s32 %v978, %v980
    %v982 = vrot.slane %v974, %v981
    %v984 = vunpack.c.l.s4 1966171168
    %v985 = vunpack.c.0.s8 %v984
    %v986 = vlaneseq
    %v987 = vshrl.u32 %v986, 7
    %v988 = vsub.s32 %v985, %v987
    %v989 = vrot.slane %v975, %v988
    %v990 = vlaneseq
    %v991 = vshrl.u32 %v990, 7
    %v992 = vsub.s32 0, %v991
    %v993 = vrot.slane %v982, %v992
    %v994 = vlaneseq
    %v995 = vshrl.u32 %v994, 7
    %v996 = vsub.s32 1, %v995
    %v997 = vrot.slane %v982, %v996
    %v998 = vlaneseq
    %v999 = vshrl.u32 %v998, 7
    %v1000 = vsub.s32 2, %v999
    %v1001 = vrot.slane %v982, %v1000
    %v1002 = vlaneseq
    %v1003 = vshrl.u32 %v1002, 7
    %v1004 = vsub.s32 3, %v1003
    %v1005 = vrot.slane %v982, %v1004
    %v1006 = vlaneseq
    %v1007 = vshrl.u32 %v1006, 7
    %v1008 = vsub.s32 0, %v1007
    %v1009 = vrot.slane %v989, %v1008
    %v1010 = vlaneseq
    %v1011 = vshrl.u32 %v1010, 7
    %v1012 = vsub.s32 1, %v1011
    %v1013 = vrot.slane %v989, %v1012
    %v1014 = vlaneseq
    %v1015 = vshrl.u32 %v1014, 7
    %v1016 = vsub.s32 2, %v1015
    %v1017 = vrot.slane %v989, %v1016
    %v1018 = vlaneseq
    %v1019 = vshrl.u32 %v1018, 7
    %v1020 = vsub.s32 3, %v1019
    %v1021 = vrot.slane %v989, %v1020
    %v1030 = vmul.f32 %v192, %v993
    %v1031 = vmul.f32 %v193, %v997
    %v1032 = vmul.f32 %v194, %v1001
    %v1033 = vmul.f32 %v195, %v1005
    %v1034 = vmul.f32 %v196, %v1009
    %v1035 = vmul.f32 %v197, %v1013
    %v1036 = vmul.f32 %v198, %v1017
    %v1037 = vmul.f32 %v199, %v1021
    %v1046 = vrot.slane %v1034, 7
    %v1047 = vsel %vm342, %v1046, %v1030
    %v1048 = vrot.slane %v1035, 7
    %v1049 = vsel %vm342, %v1048, %v1031
    %v1050 = vrot.slane %v1036, 7
    %v1051 = vsel %vm342, %v1050, %v1032
    %v1052 = vrot.slane %v1037, 7
    %v1053 = vsel %vm342, %v1052, %v1033
    %1058 = vrot.lane.b32.xlu0 %v1047, 95
    %v1059 = vpop.permute.xlu0 %1058
    %1060 = vrot.lane.b32.xlu0 %v1049, 95
    %v1061 = vpop.permute.xlu0 %1060
    %1062 = vrot.lane.b32.xlu0 %v1051, 95
    %v1063 = vpop.permute.xlu0 %1062
    %1064 = vrot.lane.b32.xlu0 %v1053, 95
    %v1065 = vpop.permute.xlu0 %1064
    %v1066 = vsel %vm362, %v1063, %v1065
    %v1067 = vsel %vm362, %v1061, %v1063
    %v1068 = vsel %vm362, %v1059, %v1061
    %v1069 = vsel %vm362, %v1065, %v1059
    %v1070 = vadd.f32 %v1068, 0.0
    %v1071 = vadd.f32 %v1067, 0.0
    %v1072 = vadd.f32 %v1066, 0.0
    %v1073 = vadd.f32 %v1069, 0.0
    %v1074 = vrot.slane %v1030, 1
    %v1075 = vsel %vm342, %v1034, %v1074
    %v1076 = vrot.slane %v1031, 1
    %v1077 = vsel %vm342, %v1035, %v1076
    %v1078 = vrot.slane %v1032, 1
    %v1079 = vsel %vm342, %v1036, %v1078
    %v1080 = vrot.slane %v1033, 1
    %v1081 = vsel %vm342, %v1037, %v1080
    %1086 = vrot.lane.b32.xlu0 %v1075, 96
    %v1087 = vpop.permute.xlu0 %1086
    %1088 = vrot.lane.b32.xlu0 %v1077, 96
    %v1089 = vpop.permute.xlu0 %1088
    %1090 = vrot.lane.b32.xlu0 %v1079, 96
    %v1091 = vpop.permute.xlu0 %1090
    %1092 = vrot.lane.b32.xlu0 %v1081, 96
    %v1093 = vpop.permute.xlu0 %1092
    %v1094 = vsel %vm391, %v1091, %v1093
    %v1095 = vsel %vm391, %v1089, %v1091
    %v1096 = vsel %vm391, %v1087, %v1089
    %v1097 = vsel %vm391, %v1093, %v1087
    %v1098 = vadd.f32 %v1070, %v1096
    %v1099 = vadd.f32 %v1071, %v1095
    %v1100 = vadd.f32 %v1072, %v1094
    %v1101 = vadd.f32 %v1073, %v1097
    %v1102 = vrot.slane %v1030, 2
    %v1103 = vrot.slane %v1034, 1
    %v1104 = vsel %vm342, %v1103, %v1102
    %v1105 = vrot.slane %v1031, 2
    %v1106 = vrot.slane %v1035, 1
    %v1107 = vsel %vm342, %v1106, %v1105
    %v1108 = vrot.slane %v1032, 2
    %v1109 = vrot.slane %v1036, 1
    %v1110 = vsel %vm342, %v1109, %v1108
    %v1111 = vrot.slane %v1033, 2
    %v1112 = vrot.slane %v1037, 1
    %v1113 = vsel %vm342, %v1112, %v1111
    %1118 = vrot.lane.b32.xlu0 %v1104, 97
    %v1119 = vpop.permute.xlu0 %1118
    %1120 = vrot.lane.b32.xlu0 %v1107, 97
    %v1121 = vpop.permute.xlu0 %1120
    %1122 = vrot.lane.b32.xlu0 %v1110, 97
    %v1123 = vpop.permute.xlu0 %1122
    %1124 = vrot.lane.b32.xlu0 %v1113, 97
    %v1125 = vpop.permute.xlu0 %1124
    %v1126 = vsel %vm424, %v1123, %v1125
    %v1127 = vsel %vm424, %v1121, %v1123
    %v1128 = vsel %vm424, %v1119, %v1121
    %v1129 = vsel %vm424, %v1125, %v1119
    %v1130 = vadd.f32 %v1098, %v1128
    %v1131 = vadd.f32 %v1099, %v1127
    %v1132 = vadd.f32 %v1100, %v1126
    %v1133 = vadd.f32 %v1101, %v1129
    %v1134 = vrot.slane %v1030, 3
    %v1135 = vrot.slane %v1034, 2
    %v1136 = vsel %vm342, %v1135, %v1134
    %v1137 = vrot.slane %v1031, 3
    %v1138 = vrot.slane %v1035, 2
    %v1139 = vsel %vm342, %v1138, %v1137
    %v1140 = vrot.slane %v1032, 3
    %v1141 = vrot.slane %v1036, 2
    %v1142 = vsel %vm342, %v1141, %v1140
    %v1143 = vrot.slane %v1033, 3
    %v1144 = vrot.slane %v1037, 2
    %v1145 = vsel %vm342, %v1144, %v1143
    %1150 = vrot.lane.b32.xlu0 %v1136, 127
    %v1151 = vpop.permute.xlu0 %1150
    %1152 = vrot.lane.b32.xlu0 %v1139, 127
    %v1153 = vpop.permute.xlu0 %1152
    %1154 = vrot.lane.b32.xlu0 %v1142, 127
    %v1155 = vpop.permute.xlu0 %1154
    %1156 = vrot.lane.b32.xlu0 %v1145, 127
    %v1157 = vpop.permute.xlu0 %1156
    %v1158 = vsel %vm457, %v1155, %v1157
    %v1159 = vsel %vm457, %v1153, %v1155
    %v1160 = vsel %vm457, %v1151, %v1153
    %v1161 = vsel %vm457, %v1157, %v1151
    %v1162 = vadd.f32 %v1130, %v1160
    %v1163 = vadd.f32 %v1131, %v1159
    %v1164 = vadd.f32 %v1132, %v1158
    %v1165 = vadd.f32 %v1133, %v1161
    %v1166 = vrot.slane %v1030, 4
    %v1167 = vrot.slane %v1034, 3
    %v1168 = vsel %vm342, %v1167, %v1166
    %v1169 = vrot.slane %v1031, 4
    %v1170 = vrot.slane %v1035, 3
    %v1171 = vsel %vm342, %v1170, %v1169
    %v1172 = vrot.slane %v1032, 4
    %v1173 = vrot.slane %v1036, 3
    %v1174 = vsel %vm342, %v1173, %v1172
    %v1175 = vrot.slane %v1033, 4
    %v1176 = vrot.slane %v1037, 3
    %v1177 = vsel %vm342, %v1176, %v1175
    %1182 = vrot.lane.b32.xlu0 %v1168, 1
    %v1183 = vpop.permute.xlu0 %1182
    %1184 = vrot.lane.b32.xlu0 %v1171, 1
    %v1185 = vpop.permute.xlu0 %1184
    %1186 = vrot.lane.b32.xlu0 %v1174, 1
    %v1187 = vpop.permute.xlu0 %1186
    %1188 = vrot.lane.b32.xlu0 %v1177, 1
    %v1189 = vpop.permute.xlu0 %1188
    %v1190 = vsel %vm490, %v1187, %v1189
    %v1191 = vsel %vm490, %v1185, %v1187
    %v1192 = vsel %vm490, %v1183, %v1185
    %v1193 = vsel %vm490, %v1189, %v1183
    %v1194 = vadd.f32 %v1162, %v1193
    %v1195 = vadd.f32 %v1163, %v1192
    %v1196 = vadd.f32 %v1164, %v1191
    %v1197 = vadd.f32 %v1165, %v1190
    %v1198 = vrot.slane %v1030, 5
    %v1199 = vrot.slane %v1034, 4
    %v1200 = vsel %vm342, %v1199, %v1198
    %v1201 = vrot.slane %v1031, 5
    %v1202 = vrot.slane %v1035, 4
    %v1203 = vsel %vm342, %v1202, %v1201
    %v1204 = vrot.slane %v1032, 5
    %v1205 = vrot.slane %v1036, 4
    %v1206 = vsel %vm342, %v1205, %v1204
    %v1207 = vrot.slane %v1033, 5
    %v1208 = vrot.slane %v1037, 4
    %v1209 = vsel %vm342, %v1208, %v1207
    %1214 = vrot.lane.b32.xlu0 %v1200, 31
    %v1215 = vpop.permute.xlu0 %1214
    %1216 = vrot.lane.b32.xlu0 %v1203, 31
    %v1217 = vpop.permute.xlu0 %1216
    %1218 = vrot.lane.b32.xlu0 %v1206, 31
    %v1219 = vpop.permute.xlu0 %1218
    %1220 = vrot.lane.b32.xlu0 %v1209, 31
    %v1221 = vpop.permute.xlu0 %1220
    %v1222 = vsel %vm523, %v1219, %v1221
    %v1223 = vsel %vm523, %v1217, %v1219
    %v1224 = vsel %vm523, %v1215, %v1217
    %v1225 = vsel %vm523, %v1221, %v1215
    %v1226 = vadd.f32 %v1194, %v1225
    %v1227 = vadd.f32 %v1195, %v1224
    %v1228 = vadd.f32 %v1196, %v1223
    %v1229 = vadd.f32 %v1197, %v1222
    %v1230 = vrot.slane %v1030, 6
    %v1231 = vrot.slane %v1034, 5
    %v1232 = vsel %vm342, %v1231, %v1230
    %v1233 = vrot.slane %v1031, 6
    %v1234 = vrot.slane %v1035, 5
    %v1235 = vsel %vm342, %v1234, %v1233
    %v1236 = vrot.slane %v1032, 6
    %v1237 = vrot.slane %v1036, 5
    %v1238 = vsel %vm342, %v1237, %v1236
    %v1239 = vrot.slane %v1033, 6
    %v1240 = vrot.slane %v1037, 5
    %v1241 = vsel %vm342, %v1240, %v1239
    %1246 = vrot.lane.b32.xlu0 %v1232, 32
    %v1247 = vpop.permute.xlu0 %1246
    %1248 = vrot.lane.b32.xlu0 %v1235, 32
    %v1249 = vpop.permute.xlu0 %1248
    %1250 = vrot.lane.b32.xlu0 %v1238, 32
    %v1251 = vpop.permute.xlu0 %1250
    %1252 = vrot.lane.b32.xlu0 %v1241, 32
    %v1253 = vpop.permute.xlu0 %1252
    %v1254 = vsel %vm556, %v1251, %v1253
    %v1255 = vsel %vm556, %v1249, %v1251
    %v1256 = vsel %vm556, %v1247, %v1249
    %v1257 = vsel %vm556, %v1253, %v1247
    %v1258 = vadd.f32 %v1226, %v1257
    %v1259 = vadd.f32 %v1227, %v1256
    %v1260 = vadd.f32 %v1228, %v1255
    %v1261 = vadd.f32 %v1229, %v1254
    %v1262 = vrot.slane %v1030, 7
    %v1263 = vrot.slane %v1034, 6
    %v1264 = vsel %vm342, %v1263, %v1262
    %v1265 = vrot.slane %v1031, 7
    %v1266 = vrot.slane %v1035, 6
    %v1267 = vsel %vm342, %v1266, %v1265
    %v1268 = vrot.slane %v1032, 7
    %v1269 = vrot.slane %v1036, 6
    %v1270 = vsel %vm342, %v1269, %v1268
    %v1271 = vrot.slane %v1033, 7
    %v1272 = vrot.slane %v1037, 6
    %v1273 = vsel %vm342, %v1272, %v1271
    %1278 = vrot.lane.b32.xlu0 %v1264, 33
    %v1279 = vpop.permute.xlu0 %1278
    %1280 = vrot.lane.b32.xlu0 %v1267, 33
    %v1281 = vpop.permute.xlu0 %1280
    %1282 = vrot.lane.b32.xlu0 %v1270, 33
    %v1283 = vpop.permute.xlu0 %1282
    %1284 = vrot.lane.b32.xlu0 %v1273, 33
    %v1285 = vpop.permute.xlu0 %1284
    %v1286 = vsel %vm589, %v1283, %v1285
    %v1287 = vsel %vm589, %v1281, %v1283
    %v1288 = vsel %vm589, %v1279, %v1281
    %v1289 = vsel %vm589, %v1285, %v1279
    %v1290 = vadd.f32 %v1258, %v1289
    %v1291 = vadd.f32 %v1259, %v1288
    %v1292 = vadd.f32 %v1260, %v1287
    %v1293 = vadd.f32 %v1261, %v1286
    %v1294 = vmul.f32 %v1290, %v237
    %v1295 = vmul.f32 %v1291, %v238
    %v1296 = vmul.f32 %v1292, %v239
    %v1297 = vmul.f32 %v1293, %v240
    %v1298 = vadd.f32 %v950, %v1294
    %v1299 = vadd.f32 %v951, %v1295
    %v1300 = vadd.f32 %v952, %v1296
    %v1301 = vadd.f32 %v953, %v1297
    %v1306 = vcombine.low %v1294, %v1295
    %v1307 = vcombine.low %v1296, %v1297
    %v1309 = vunpack.c.l.s4 1966171168
    %v1310 = vunpack.c.0.s8 %v1309
    %v1311 = vlaneseq
    %v1312 = vshrl.u32 %v1311, 7
    %v1313 = vsub.s32 %v1310, %v1312
    %v1314 = vrot.slane %v1306, %v1313
    %v1316 = vunpack.c.l.s4 1966171168
    %v1317 = vunpack.c.0.s8 %v1316
    %v1318 = vlaneseq
    %v1319 = vshrl.u32 %v1318, 7
    %v1320 = vsub.s32 %v1317, %v1319
    %v1321 = vrot.slane %v1307, %v1320
    %v1322 = vcombine.low %v1314, %v1321
    %v1323 = vcombine.high %v1314, %v1321
    %v1325 = vunpack.c.l.s4 1966171168
    %v1326 = vunpack.c.0.s8 %v1325
    %v1327 = vlaneseq
    %v1328 = vshrl.u32 %v1327, 7
    %v1329 = vsub.s32 %v1326, %v1328
    %v1330 = vrot.slane %v1322, %v1329
    %v1332 = vunpack.c.l.s4 1966171168
    %v1333 = vunpack.c.0.s8 %v1332
    %v1334 = vlaneseq
    %v1335 = vshrl.u32 %v1334, 7
    %v1336 = vsub.s32 %v1333, %v1335
    %v1337 = vrot.slane %v1323, %v1336
    %v1338 = vlaneseq
    %v1339 = vshrl.u32 %v1338, 7
    %v1340 = vsub.s32 0, %v1339
    %v1341 = vrot.slane %v1330, %v1340
    %v1342 = vlaneseq
    %v1343 = vshrl.u32 %v1342, 7
    %v1344 = vsub.s32 1, %v1343
    %v1345 = vrot.slane %v1330, %v1344
    %v1346 = vlaneseq
    %v1347 = vshrl.u32 %v1346, 7
    %v1348 = vsub.s32 2, %v1347
    %v1349 = vrot.slane %v1330, %v1348
    %v1350 = vlaneseq
    %v1351 = vshrl.u32 %v1350, 7
    %v1352 = vsub.s32 3, %v1351
    %v1353 = vrot.slane %v1330, %v1352
    %v1354 = vlaneseq
    %v1355 = vshrl.u32 %v1354, 7
    %v1356 = vsub.s32 0, %v1355
    %v1357 = vrot.slane %v1337, %v1356
    %v1358 = vlaneseq
    %v1359 = vshrl.u32 %v1358, 7
    %v1360 = vsub.s32 1, %v1359
    %v1361 = vrot.slane %v1337, %v1360
    %v1362 = vlaneseq
    %v1363 = vshrl.u32 %v1362, 7
    %v1364 = vsub.s32 2, %v1363
    %v1365 = vrot.slane %v1337, %v1364
    %v1366 = vlaneseq
    %v1367 = vshrl.u32 %v1366, 7
    %v1368 = vsub.s32 3, %v1367
    %v1369 = vrot.slane %v1337, %v1368
    %v1378 = vmul.f32 %v192, %v1341
    %v1379 = vmul.f32 %v193, %v1345
    %v1380 = vmul.f32 %v194, %v1349
    %v1381 = vmul.f32 %v195, %v1353
    %v1382 = vmul.f32 %v196, %v1357
    %v1383 = vmul.f32 %v197, %v1361
    %v1384 = vmul.f32 %v198, %v1365
    %v1385 = vmul.f32 %v199, %v1369
    %v1394 = vrot.slane %v1382, 7
    %v1395 = vsel %vm342, %v1394, %v1378
    %v1396 = vrot.slane %v1383, 7
    %v1397 = vsel %vm342, %v1396, %v1379
    %v1398 = vrot.slane %v1384, 7
    %v1399 = vsel %vm342, %v1398, %v1380
    %v1400 = vrot.slane %v1385, 7
    %v1401 = vsel %vm342, %v1400, %v1381
    %1406 = vrot.lane.b32.xlu0 %v1395, 95
    %v1407 = vpop.permute.xlu0 %1406
    %1408 = vrot.lane.b32.xlu0 %v1397, 95
    %v1409 = vpop.permute.xlu0 %1408
    %1410 = vrot.lane.b32.xlu0 %v1399, 95
    %v1411 = vpop.permute.xlu0 %1410
    %1412 = vrot.lane.b32.xlu0 %v1401, 95
    %v1413 = vpop.permute.xlu0 %1412
    %v1414 = vsel %vm362, %v1411, %v1413
    %v1415 = vsel %vm362, %v1409, %v1411
    %v1416 = vsel %vm362, %v1407, %v1409
    %v1417 = vsel %vm362, %v1413, %v1407
    %v1418 = vadd.f32 %v1416, 0.0
    %v1419 = vadd.f32 %v1415, 0.0
    %v1420 = vadd.f32 %v1414, 0.0
    %v1421 = vadd.f32 %v1417, 0.0
    %v1422 = vrot.slane %v1378, 1
    %v1423 = vsel %vm342, %v1382, %v1422
    %v1424 = vrot.slane %v1379, 1
    %v1425 = vsel %vm342, %v1383, %v1424
    %v1426 = vrot.slane %v1380, 1
    %v1427 = vsel %vm342, %v1384, %v1426
    %v1428 = vrot.slane %v1381, 1
    %v1429 = vsel %vm342, %v1385, %v1428
    %1434 = vrot.lane.b32.xlu0 %v1423, 96
    %v1435 = vpop.permute.xlu0 %1434
    %1436 = vrot.lane.b32.xlu0 %v1425, 96
    %v1437 = vpop.permute.xlu0 %1436
    %1438 = vrot.lane.b32.xlu0 %v1427, 96
    %v1439 = vpop.permute.xlu0 %1438
    %1440 = vrot.lane.b32.xlu0 %v1429, 96
    %v1441 = vpop.permute.xlu0 %1440
    %v1442 = vsel %vm391, %v1439, %v1441
    %v1443 = vsel %vm391, %v1437, %v1439
    %v1444 = vsel %vm391, %v1435, %v1437
    %v1445 = vsel %vm391, %v1441, %v1435
    %v1446 = vadd.f32 %v1418, %v1444
    %v1447 = vadd.f32 %v1419, %v1443
    %v1448 = vadd.f32 %v1420, %v1442
    %v1449 = vadd.f32 %v1421, %v1445
    %v1450 = vrot.slane %v1378, 2
    %v1451 = vrot.slane %v1382, 1
    %v1452 = vsel %vm342, %v1451, %v1450
    %v1453 = vrot.slane %v1379, 2
    %v1454 = vrot.slane %v1383, 1
    %v1455 = vsel %vm342, %v1454, %v1453
    %v1456 = vrot.slane %v1380, 2
    %v1457 = vrot.slane %v1384, 1
    %v1458 = vsel %vm342, %v1457, %v1456
    %v1459 = vrot.slane %v1381, 2
    %v1460 = vrot.slane %v1385, 1
    %v1461 = vsel %vm342, %v1460, %v1459
    %1466 = vrot.lane.b32.xlu0 %v1452, 97
    %v1467 = vpop.permute.xlu0 %1466
    %1468 = vrot.lane.b32.xlu0 %v1455, 97
    %v1469 = vpop.permute.xlu0 %1468
    %1470 = vrot.lane.b32.xlu0 %v1458, 97
    %v1471 = vpop.permute.xlu0 %1470
    %1472 = vrot.lane.b32.xlu0 %v1461, 97
    %v1473 = vpop.permute.xlu0 %1472
    %v1474 = vsel %vm424, %v1471, %v1473
    %v1475 = vsel %vm424, %v1469, %v1471
    %v1476 = vsel %vm424, %v1467, %v1469
    %v1477 = vsel %vm424, %v1473, %v1467
    %v1478 = vadd.f32 %v1446, %v1476
    %v1479 = vadd.f32 %v1447, %v1475
    %v1480 = vadd.f32 %v1448, %v1474
    %v1481 = vadd.f32 %v1449, %v1477
    %v1482 = vrot.slane %v1378, 3
    %v1483 = vrot.slane %v1382, 2
    %v1484 = vsel %vm342, %v1483, %v1482
    %v1485 = vrot.slane %v1379, 3
    %v1486 = vrot.slane %v1383, 2
    %v1487 = vsel %vm342, %v1486, %v1485
    %v1488 = vrot.slane %v1380, 3
    %v1489 = vrot.slane %v1384, 2
    %v1490 = vsel %vm342, %v1489, %v1488
    %v1491 = vrot.slane %v1381, 3
    %v1492 = vrot.slane %v1385, 2
    %v1493 = vsel %vm342, %v1492, %v1491
    %1498 = vrot.lane.b32.xlu0 %v1484, 127
    %v1499 = vpop.permute.xlu0 %1498
    %1500 = vrot.lane.b32.xlu0 %v1487, 127
    %v1501 = vpop.permute.xlu0 %1500
    %1502 = vrot.lane.b32.xlu0 %v1490, 127
    %v1503 = vpop.permute.xlu0 %1502
    %1504 = vrot.lane.b32.xlu0 %v1493, 127
    %v1505 = vpop.permute.xlu0 %1504
    %v1506 = vsel %vm457, %v1503, %v1505
    %v1507 = vsel %vm457, %v1501, %v1503
    %v1508 = vsel %vm457, %v1499, %v1501
    %v1509 = vsel %vm457, %v1505, %v1499
    %v1510 = vadd.f32 %v1478, %v1508
    %v1511 = vadd.f32 %v1479, %v1507
    %v1512 = vadd.f32 %v1480, %v1506
    %v1513 = vadd.f32 %v1481, %v1509
    %v1514 = vrot.slane %v1378, 4
    %v1515 = vrot.slane %v1382, 3
    %v1516 = vsel %vm342, %v1515, %v1514
    %v1517 = vrot.slane %v1379, 4
    %v1518 = vrot.slane %v1383, 3
    %v1519 = vsel %vm342, %v1518, %v1517
    %v1520 = vrot.slane %v1380, 4
    %v1521 = vrot.slane %v1384, 3
    %v1522 = vsel %vm342, %v1521, %v1520
    %v1523 = vrot.slane %v1381, 4
    %v1524 = vrot.slane %v1385, 3
    %v1525 = vsel %vm342, %v1524, %v1523
    %1530 = vrot.lane.b32.xlu0 %v1516, 1
    %v1531 = vpop.permute.xlu0 %1530
    %1532 = vrot.lane.b32.xlu0 %v1519, 1
    %v1533 = vpop.permute.xlu0 %1532
    %1534 = vrot.lane.b32.xlu0 %v1522, 1
    %v1535 = vpop.permute.xlu0 %1534
    %1536 = vrot.lane.b32.xlu0 %v1525, 1
    %v1537 = vpop.permute.xlu0 %1536
    %v1538 = vsel %vm490, %v1535, %v1537
    %v1539 = vsel %vm490, %v1533, %v1535
    %v1540 = vsel %vm490, %v1531, %v1533
    %v1541 = vsel %vm490, %v1537, %v1531
    %v1542 = vadd.f32 %v1510, %v1541
    %v1543 = vadd.f32 %v1511, %v1540
    %v1544 = vadd.f32 %v1512, %v1539
    %v1545 = vadd.f32 %v1513, %v1538
    %v1546 = vrot.slane %v1378, 5
    %v1547 = vrot.slane %v1382, 4
    %v1548 = vsel %vm342, %v1547, %v1546
    %v1549 = vrot.slane %v1379, 5
    %v1550 = vrot.slane %v1383, 4
    %v1551 = vsel %vm342, %v1550, %v1549
    %v1552 = vrot.slane %v1380, 5
    %v1553 = vrot.slane %v1384, 4
    %v1554 = vsel %vm342, %v1553, %v1552
    %v1555 = vrot.slane %v1381, 5
    %v1556 = vrot.slane %v1385, 4
    %v1557 = vsel %vm342, %v1556, %v1555
    %1562 = vrot.lane.b32.xlu0 %v1548, 31
    %v1563 = vpop.permute.xlu0 %1562
    %1564 = vrot.lane.b32.xlu0 %v1551, 31
    %v1565 = vpop.permute.xlu0 %1564
    %1566 = vrot.lane.b32.xlu0 %v1554, 31
    %v1567 = vpop.permute.xlu0 %1566
    %1568 = vrot.lane.b32.xlu0 %v1557, 31
    %v1569 = vpop.permute.xlu0 %1568
    %v1570 = vsel %vm523, %v1567, %v1569
    %v1571 = vsel %vm523, %v1565, %v1567
    %v1572 = vsel %vm523, %v1563, %v1565
    %v1573 = vsel %vm523, %v1569, %v1563
    %v1574 = vadd.f32 %v1542, %v1573
    %v1575 = vadd.f32 %v1543, %v1572
    %v1576 = vadd.f32 %v1544, %v1571
    %v1577 = vadd.f32 %v1545, %v1570
    %v1578 = vrot.slane %v1378, 6
    %v1579 = vrot.slane %v1382, 5
    %v1580 = vsel %vm342, %v1579, %v1578
    %v1581 = vrot.slane %v1379, 6
    %v1582 = vrot.slane %v1383, 5
    %v1583 = vsel %vm342, %v1582, %v1581
    %v1584 = vrot.slane %v1380, 6
    %v1585 = vrot.slane %v1384, 5
    %v1586 = vsel %vm342, %v1585, %v1584
    %v1587 = vrot.slane %v1381, 6
    %v1588 = vrot.slane %v1385, 5
    %v1589 = vsel %vm342, %v1588, %v1587
    %1594 = vrot.lane.b32.xlu0 %v1580, 32
    %v1595 = vpop.permute.xlu0 %1594
    %1596 = vrot.lane.b32.xlu0 %v1583, 32
    %v1597 = vpop.permute.xlu0 %1596
    %1598 = vrot.lane.b32.xlu0 %v1586, 32
    %v1599 = vpop.permute.xlu0 %1598
    %1600 = vrot.lane.b32.xlu0 %v1589, 32
    %v1601 = vpop.permute.xlu0 %1600
    %v1602 = vsel %vm556, %v1599, %v1601
    %v1603 = vsel %vm556, %v1597, %v1599
    %v1604 = vsel %vm556, %v1595, %v1597
    %v1605 = vsel %vm556, %v1601, %v1595
    %v1606 = vadd.f32 %v1574, %v1605
    %v1607 = vadd.f32 %v1575, %v1604
    %v1608 = vadd.f32 %v1576, %v1603
    %v1609 = vadd.f32 %v1577, %v1602
    %v1610 = vrot.slane %v1378, 7
    %v1611 = vrot.slane %v1382, 6
    %v1612 = vsel %vm342, %v1611, %v1610
    %v1613 = vrot.slane %v1379, 7
    %v1614 = vrot.slane %v1383, 6
    %v1615 = vsel %vm342, %v1614, %v1613
    %v1616 = vrot.slane %v1380, 7
    %v1617 = vrot.slane %v1384, 6
    %v1618 = vsel %vm342, %v1617, %v1616
    %v1619 = vrot.slane %v1381, 7
    %v1620 = vrot.slane %v1385, 6
    %v1621 = vsel %vm342, %v1620, %v1619
    %1626 = vrot.lane.b32.xlu0 %v1612, 33
    %v1627 = vpop.permute.xlu0 %1626
    %1628 = vrot.lane.b32.xlu0 %v1615, 33
    %v1629 = vpop.permute.xlu0 %1628
    %1630 = vrot.lane.b32.xlu0 %v1618, 33
    %v1631 = vpop.permute.xlu0 %1630
    %1632 = vrot.lane.b32.xlu0 %v1621, 33
    %v1633 = vpop.permute.xlu0 %1632
    %v1634 = vsel %vm589, %v1631, %v1633
    %v1635 = vsel %vm589, %v1629, %v1631
    %v1636 = vsel %vm589, %v1627, %v1629
    %v1637 = vsel %vm589, %v1633, %v1627
    %v1638 = vadd.f32 %v1606, %v1637
    %v1639 = vadd.f32 %v1607, %v1636
    %v1640 = vadd.f32 %v1608, %v1635
    %v1641 = vadd.f32 %v1609, %v1634
    %v1642 = vmul.f32 %v1638, %v237
    %v1643 = vmul.f32 %v1639, %v238
    %v1644 = vmul.f32 %v1640, %v239
    %v1645 = vmul.f32 %v1641, %v240
    %v1646 = vadd.f32 %v1298, %v1642
    %v1647 = vadd.f32 %v1299, %v1643
    %v1648 = vadd.f32 %v1300, %v1644
    %v1649 = vadd.f32 %v1301, %v1645
    %v1654 = vcombine.low %v1642, %v1643
    %v1655 = vcombine.low %v1644, %v1645
    %v1657 = vunpack.c.l.s4 1966171168
    %v1658 = vunpack.c.0.s8 %v1657
    %v1659 = vlaneseq
    %v1660 = vshrl.u32 %v1659, 7
    %v1661 = vsub.s32 %v1658, %v1660
    %v1662 = vrot.slane %v1654, %v1661
    %v1664 = vunpack.c.l.s4 1966171168
    %v1665 = vunpack.c.0.s8 %v1664
    %v1666 = vlaneseq
    %v1667 = vshrl.u32 %v1666, 7
    %v1668 = vsub.s32 %v1665, %v1667
    %v1669 = vrot.slane %v1655, %v1668
    %v1670 = vcombine.low %v1662, %v1669
    %v1671 = vcombine.high %v1662, %v1669
    %v1673 = vunpack.c.l.s4 1966171168
    %v1674 = vunpack.c.0.s8 %v1673
    %v1675 = vlaneseq
    %v1676 = vshrl.u32 %v1675, 7
    %v1677 = vsub.s32 %v1674, %v1676
    %v1678 = vrot.slane %v1670, %v1677
    %v1680 = vunpack.c.l.s4 1966171168
    %v1681 = vunpack.c.0.s8 %v1680
    %v1682 = vlaneseq
    %v1683 = vshrl.u32 %v1682, 7
    %v1684 = vsub.s32 %v1681, %v1683
    %v1685 = vrot.slane %v1671, %v1684
    %v1686 = vlaneseq
    %v1687 = vshrl.u32 %v1686, 7
    %v1688 = vsub.s32 0, %v1687
    %v1689 = vrot.slane %v1678, %v1688
    %v1690 = vlaneseq
    %v1691 = vshrl.u32 %v1690, 7
    %v1692 = vsub.s32 1, %v1691
    %v1693 = vrot.slane %v1678, %v1692
    %v1694 = vlaneseq
    %v1695 = vshrl.u32 %v1694, 7
    %v1696 = vsub.s32 2, %v1695
    %v1697 = vrot.slane %v1678, %v1696
    %v1698 = vlaneseq
    %v1699 = vshrl.u32 %v1698, 7
    %v1700 = vsub.s32 3, %v1699
    %v1701 = vrot.slane %v1678, %v1700
    %v1702 = vlaneseq
    %v1703 = vshrl.u32 %v1702, 7
    %v1704 = vsub.s32 0, %v1703
    %v1705 = vrot.slane %v1685, %v1704
    %v1706 = vlaneseq
    %v1707 = vshrl.u32 %v1706, 7
    %v1708 = vsub.s32 1, %v1707
    %v1709 = vrot.slane %v1685, %v1708
    %v1710 = vlaneseq
    %v1711 = vshrl.u32 %v1710, 7
    %v1712 = vsub.s32 2, %v1711
    %v1713 = vrot.slane %v1685, %v1712
    %v1714 = vlaneseq
    %v1715 = vshrl.u32 %v1714, 7
    %v1716 = vsub.s32 3, %v1715
    %v1717 = vrot.slane %v1685, %v1716
    %v1726 = vmul.f32 %v192, %v1689
    %v1727 = vmul.f32 %v193, %v1693
    %v1728 = vmul.f32 %v194, %v1697
    %v1729 = vmul.f32 %v195, %v1701
    %v1730 = vmul.f32 %v196, %v1705
    %v1731 = vmul.f32 %v197, %v1709
    %v1732 = vmul.f32 %v198, %v1713
    %v1733 = vmul.f32 %v199, %v1717
    %v1742 = vrot.slane %v1730, 7
    %v1743 = vsel %vm342, %v1742, %v1726
    %v1744 = vrot.slane %v1731, 7
    %v1745 = vsel %vm342, %v1744, %v1727
    %v1746 = vrot.slane %v1732, 7
    %v1747 = vsel %vm342, %v1746, %v1728
    %v1748 = vrot.slane %v1733, 7
    %v1749 = vsel %vm342, %v1748, %v1729
    %1754 = vrot.lane.b32.xlu0 %v1743, 95
    %v1755 = vpop.permute.xlu0 %1754
    %1756 = vrot.lane.b32.xlu0 %v1745, 95
    %v1757 = vpop.permute.xlu0 %1756
    %1758 = vrot.lane.b32.xlu0 %v1747, 95
    %v1759 = vpop.permute.xlu0 %1758
    %1760 = vrot.lane.b32.xlu0 %v1749, 95
    %v1761 = vpop.permute.xlu0 %1760
    %v1762 = vsel %vm362, %v1759, %v1761
    %v1763 = vsel %vm362, %v1757, %v1759
    %v1764 = vsel %vm362, %v1755, %v1757
    %v1765 = vsel %vm362, %v1761, %v1755
    %v1766 = vadd.f32 %v1764, 0.0
    %v1767 = vadd.f32 %v1763, 0.0
    %v1768 = vadd.f32 %v1762, 0.0
    %v1769 = vadd.f32 %v1765, 0.0
    %v1770 = vrot.slane %v1726, 1
    %v1771 = vsel %vm342, %v1730, %v1770
    %v1772 = vrot.slane %v1727, 1
    %v1773 = vsel %vm342, %v1731, %v1772
    %v1774 = vrot.slane %v1728, 1
    %v1775 = vsel %vm342, %v1732, %v1774
    %v1776 = vrot.slane %v1729, 1
    %v1777 = vsel %vm342, %v1733, %v1776
    %1782 = vrot.lane.b32.xlu0 %v1771, 96
    %v1783 = vpop.permute.xlu0 %1782
    %1784 = vrot.lane.b32.xlu0 %v1773, 96
    %v1785 = vpop.permute.xlu0 %1784
    %1786 = vrot.lane.b32.xlu0 %v1775, 96
    %v1787 = vpop.permute.xlu0 %1786
    %1788 = vrot.lane.b32.xlu0 %v1777, 96
    %v1789 = vpop.permute.xlu0 %1788
    %v1790 = vsel %vm391, %v1787, %v1789
    %v1791 = vsel %vm391, %v1785, %v1787
    %v1792 = vsel %vm391, %v1783, %v1785
    %v1793 = vsel %vm391, %v1789, %v1783
    %v1794 = vadd.f32 %v1766, %v1792
    %v1795 = vadd.f32 %v1767, %v1791
    %v1796 = vadd.f32 %v1768, %v1790
    %v1797 = vadd.f32 %v1769, %v1793
    %v1798 = vrot.slane %v1726, 2
    %v1799 = vrot.slane %v1730, 1
    %v1800 = vsel %vm342, %v1799, %v1798
    %v1801 = vrot.slane %v1727, 2
    %v1802 = vrot.slane %v1731, 1
    %v1803 = vsel %vm342, %v1802, %v1801
    %v1804 = vrot.slane %v1728, 2
    %v1805 = vrot.slane %v1732, 1
    %v1806 = vsel %vm342, %v1805, %v1804
    %v1807 = vrot.slane %v1729, 2
    %v1808 = vrot.slane %v1733, 1
    %v1809 = vsel %vm342, %v1808, %v1807
    %1814 = vrot.lane.b32.xlu0 %v1800, 97
    %v1815 = vpop.permute.xlu0 %1814
    %1816 = vrot.lane.b32.xlu0 %v1803, 97
    %v1817 = vpop.permute.xlu0 %1816
    %1818 = vrot.lane.b32.xlu0 %v1806, 97
    %v1819 = vpop.permute.xlu0 %1818
    %1820 = vrot.lane.b32.xlu0 %v1809, 97
    %v1821 = vpop.permute.xlu0 %1820
    %v1822 = vsel %vm424, %v1819, %v1821
    %v1823 = vsel %vm424, %v1817, %v1819
    %v1824 = vsel %vm424, %v1815, %v1817
    %v1825 = vsel %vm424, %v1821, %v1815
    %v1826 = vadd.f32 %v1794, %v1824
    %v1827 = vadd.f32 %v1795, %v1823
    %v1828 = vadd.f32 %v1796, %v1822
    %v1829 = vadd.f32 %v1797, %v1825
    %v1830 = vrot.slane %v1726, 3
    %v1831 = vrot.slane %v1730, 2
    %v1832 = vsel %vm342, %v1831, %v1830
    %v1833 = vrot.slane %v1727, 3
    %v1834 = vrot.slane %v1731, 2
    %v1835 = vsel %vm342, %v1834, %v1833
    %v1836 = vrot.slane %v1728, 3
    %v1837 = vrot.slane %v1732, 2
    %v1838 = vsel %vm342, %v1837, %v1836
    %v1839 = vrot.slane %v1729, 3
    %v1840 = vrot.slane %v1733, 2
    %v1841 = vsel %vm342, %v1840, %v1839
    %1846 = vrot.lane.b32.xlu0 %v1832, 127
    %v1847 = vpop.permute.xlu0 %1846
    %1848 = vrot.lane.b32.xlu0 %v1835, 127
    %v1849 = vpop.permute.xlu0 %1848
    %1850 = vrot.lane.b32.xlu0 %v1838, 127
    %v1851 = vpop.permute.xlu0 %1850
    %1852 = vrot.lane.b32.xlu0 %v1841, 127
    %v1853 = vpop.permute.xlu0 %1852
    %v1854 = vsel %vm457, %v1851, %v1853
    %v1855 = vsel %vm457, %v1849, %v1851
    %v1856 = vsel %vm457, %v1847, %v1849
    %v1857 = vsel %vm457, %v1853, %v1847
    %v1858 = vadd.f32 %v1826, %v1856
    %v1859 = vadd.f32 %v1827, %v1855
    %v1860 = vadd.f32 %v1828, %v1854
    %v1861 = vadd.f32 %v1829, %v1857
    %v1862 = vrot.slane %v1726, 4
    %v1863 = vrot.slane %v1730, 3
    %v1864 = vsel %vm342, %v1863, %v1862
    %v1865 = vrot.slane %v1727, 4
    %v1866 = vrot.slane %v1731, 3
    %v1867 = vsel %vm342, %v1866, %v1865
    %v1868 = vrot.slane %v1728, 4
    %v1869 = vrot.slane %v1732, 3
    %v1870 = vsel %vm342, %v1869, %v1868
    %v1871 = vrot.slane %v1729, 4
    %v1872 = vrot.slane %v1733, 3
    %v1873 = vsel %vm342, %v1872, %v1871
    %1878 = vrot.lane.b32.xlu0 %v1864, 1
    %v1879 = vpop.permute.xlu0 %1878
    %1880 = vrot.lane.b32.xlu0 %v1867, 1
    %v1881 = vpop.permute.xlu0 %1880
    %1882 = vrot.lane.b32.xlu0 %v1870, 1
    %v1883 = vpop.permute.xlu0 %1882
    %1884 = vrot.lane.b32.xlu0 %v1873, 1
    %v1885 = vpop.permute.xlu0 %1884
    %v1886 = vsel %vm490, %v1883, %v1885
    %v1887 = vsel %vm490, %v1881, %v1883
    %v1888 = vsel %vm490, %v1879, %v1881
    %v1889 = vsel %vm490, %v1885, %v1879
    %v1890 = vadd.f32 %v1858, %v1889
    %v1891 = vadd.f32 %v1859, %v1888
    %v1892 = vadd.f32 %v1860, %v1887
    %v1893 = vadd.f32 %v1861, %v1886
    %v1894 = vrot.slane %v1726, 5
    %v1895 = vrot.slane %v1730, 4
    %v1896 = vsel %vm342, %v1895, %v1894
    %v1897 = vrot.slane %v1727, 5
    %v1898 = vrot.slane %v1731, 4
    %v1899 = vsel %vm342, %v1898, %v1897
    %v1900 = vrot.slane %v1728, 5
    %v1901 = vrot.slane %v1732, 4
    %v1902 = vsel %vm342, %v1901, %v1900
    %v1903 = vrot.slane %v1729, 5
    %v1904 = vrot.slane %v1733, 4
    %v1905 = vsel %vm342, %v1904, %v1903
    %1910 = vrot.lane.b32.xlu0 %v1896, 31
    %v1911 = vpop.permute.xlu0 %1910
    %1912 = vrot.lane.b32.xlu0 %v1899, 31
    %v1913 = vpop.permute.xlu0 %1912
    %1914 = vrot.lane.b32.xlu0 %v1902, 31
    %v1915 = vpop.permute.xlu0 %1914
    %1916 = vrot.lane.b32.xlu0 %v1905, 31
    %v1917 = vpop.permute.xlu0 %1916
    %v1918 = vsel %vm523, %v1915, %v1917
    %v1919 = vsel %vm523, %v1913, %v1915
    %v1920 = vsel %vm523, %v1911, %v1913
    %v1921 = vsel %vm523, %v1917, %v1911
    %v1922 = vadd.f32 %v1890, %v1921
    %v1923 = vadd.f32 %v1891, %v1920
    %v1924 = vadd.f32 %v1892, %v1919
    %v1925 = vadd.f32 %v1893, %v1918
    %v1926 = vrot.slane %v1726, 6
    %v1927 = vrot.slane %v1730, 5
    %v1928 = vsel %vm342, %v1927, %v1926
    %v1929 = vrot.slane %v1727, 6
    %v1930 = vrot.slane %v1731, 5
    %v1931 = vsel %vm342, %v1930, %v1929
    %v1932 = vrot.slane %v1728, 6
    %v1933 = vrot.slane %v1732, 5
    %v1934 = vsel %vm342, %v1933, %v1932
    %v1935 = vrot.slane %v1729, 6
    %v1936 = vrot.slane %v1733, 5
    %v1937 = vsel %vm342, %v1936, %v1935
    %1942 = vrot.lane.b32.xlu0 %v1928, 32
    %v1943 = vpop.permute.xlu0 %1942
    %1944 = vrot.lane.b32.xlu0 %v1931, 32
    %v1945 = vpop.permute.xlu0 %1944
    %1946 = vrot.lane.b32.xlu0 %v1934, 32
    %v1947 = vpop.permute.xlu0 %1946
    %1948 = vrot.lane.b32.xlu0 %v1937, 32
    %v1949 = vpop.permute.xlu0 %1948
    %v1950 = vsel %vm556, %v1947, %v1949
    %v1951 = vsel %vm556, %v1945, %v1947
    %v1952 = vsel %vm556, %v1943, %v1945
    %v1953 = vsel %vm556, %v1949, %v1943
    %v1954 = vadd.f32 %v1922, %v1953
    %v1955 = vadd.f32 %v1923, %v1952
    %v1956 = vadd.f32 %v1924, %v1951
    %v1957 = vadd.f32 %v1925, %v1950
    %v1958 = vrot.slane %v1726, 7
    %v1959 = vrot.slane %v1730, 6
    %v1960 = vsel %vm342, %v1959, %v1958
    %v1961 = vrot.slane %v1727, 7
    %v1962 = vrot.slane %v1731, 6
    %v1963 = vsel %vm342, %v1962, %v1961
    %v1964 = vrot.slane %v1728, 7
    %v1965 = vrot.slane %v1732, 6
    %v1966 = vsel %vm342, %v1965, %v1964
    %v1967 = vrot.slane %v1729, 7
    %v1968 = vrot.slane %v1733, 6
    %v1969 = vsel %vm342, %v1968, %v1967
    %1974 = vrot.lane.b32.xlu0 %v1960, 33
    %v1975 = vpop.permute.xlu0 %1974
    %1976 = vrot.lane.b32.xlu0 %v1963, 33
    %v1977 = vpop.permute.xlu0 %1976
    %1978 = vrot.lane.b32.xlu0 %v1966, 33
    %v1979 = vpop.permute.xlu0 %1978
    %1980 = vrot.lane.b32.xlu0 %v1969, 33
    %v1981 = vpop.permute.xlu0 %1980
    %v1982 = vsel %vm589, %v1979, %v1981
    %v1983 = vsel %vm589, %v1977, %v1979
    %v1984 = vsel %vm589, %v1975, %v1977
    %v1985 = vsel %vm589, %v1981, %v1975
    %v1986 = vadd.f32 %v1954, %v1985
    %v1987 = vadd.f32 %v1955, %v1984
    %v1988 = vadd.f32 %v1956, %v1983
    %v1989 = vadd.f32 %v1957, %v1982
    %v1990 = vmul.f32 %v1986, %v237
    %v1991 = vmul.f32 %v1987, %v238
    %v1992 = vmul.f32 %v1988, %v239
    %v1993 = vmul.f32 %v1989, %v240
    %v1994 = vadd.f32 %v1646, %v1990
    %v1995 = vadd.f32 %v1647, %v1991
    %v1996 = vadd.f32 %v1648, %v1992
    %v1997 = vadd.f32 %v1649, %v1993
    %v2002 = vcombine.low %v1990, %v1991
    %v2003 = vcombine.low %v1992, %v1993
    %v2005 = vunpack.c.l.s4 1966171168
    %v2006 = vunpack.c.0.s8 %v2005
    %v2007 = vlaneseq
    %v2008 = vshrl.u32 %v2007, 7
    %v2009 = vsub.s32 %v2006, %v2008
    %v2010 = vrot.slane %v2002, %v2009
    %v2012 = vunpack.c.l.s4 1966171168
    %v2013 = vunpack.c.0.s8 %v2012
    %v2014 = vlaneseq
    %v2015 = vshrl.u32 %v2014, 7
    %v2016 = vsub.s32 %v2013, %v2015
    %v2017 = vrot.slane %v2003, %v2016
    %v2018 = vcombine.low %v2010, %v2017
    %v2019 = vcombine.high %v2010, %v2017
    %v2021 = vunpack.c.l.s4 1966171168
    %v2022 = vunpack.c.0.s8 %v2021
    %v2023 = vlaneseq
    %v2024 = vshrl.u32 %v2023, 7
    %v2025 = vsub.s32 %v2022, %v2024
    %v2026 = vrot.slane %v2018, %v2025
    %v2028 = vunpack.c.l.s4 1966171168
    %v2029 = vunpack.c.0.s8 %v2028
    %v2030 = vlaneseq
    %v2031 = vshrl.u32 %v2030, 7
    %v2032 = vsub.s32 %v2029, %v2031
    %v2033 = vrot.slane %v2019, %v2032
    %v2034 = vlaneseq
    %v2035 = vshrl.u32 %v2034, 7
    %v2036 = vsub.s32 0, %v2035
    %v2037 = vrot.slane %v2026, %v2036
    %v2038 = vlaneseq
    %v2039 = vshrl.u32 %v2038, 7
    %v2040 = vsub.s32 1, %v2039
    %v2041 = vrot.slane %v2026, %v2040
    %v2042 = vlaneseq
    %v2043 = vshrl.u32 %v2042, 7
    %v2044 = vsub.s32 2, %v2043
    %v2045 = vrot.slane %v2026, %v2044
    %v2046 = vlaneseq
    %v2047 = vshrl.u32 %v2046, 7
    %v2048 = vsub.s32 3, %v2047
    %v2049 = vrot.slane %v2026, %v2048
    %v2050 = vlaneseq
    %v2051 = vshrl.u32 %v2050, 7
    %v2052 = vsub.s32 0, %v2051
    %v2053 = vrot.slane %v2033, %v2052
    %v2054 = vlaneseq
    %v2055 = vshrl.u32 %v2054, 7
    %v2056 = vsub.s32 1, %v2055
    %v2057 = vrot.slane %v2033, %v2056
    %v2058 = vlaneseq
    %v2059 = vshrl.u32 %v2058, 7
    %v2060 = vsub.s32 2, %v2059
    %v2061 = vrot.slane %v2033, %v2060
    %v2062 = vlaneseq
    %v2063 = vshrl.u32 %v2062, 7
    %v2064 = vsub.s32 3, %v2063
    %v2065 = vrot.slane %v2033, %v2064
    %v2074 = vmul.f32 %v192, %v2037
    %v2075 = vmul.f32 %v193, %v2041
    %v2076 = vmul.f32 %v194, %v2045
    %v2077 = vmul.f32 %v195, %v2049
    %v2078 = vmul.f32 %v196, %v2053
    %v2079 = vmul.f32 %v197, %v2057
    %v2080 = vmul.f32 %v198, %v2061
    %v2081 = vmul.f32 %v199, %v2065
    %v2090 = vrot.slane %v2078, 7
    %v2091 = vsel %vm342, %v2090, %v2074
    %v2092 = vrot.slane %v2079, 7
    %v2093 = vsel %vm342, %v2092, %v2075
    %v2094 = vrot.slane %v2080, 7
    %v2095 = vsel %vm342, %v2094, %v2076
    %v2096 = vrot.slane %v2081, 7
    %v2097 = vsel %vm342, %v2096, %v2077
    %2102 = vrot.lane.b32.xlu0 %v2091, 95
    %v2103 = vpop.permute.xlu0 %2102
    %2104 = vrot.lane.b32.xlu0 %v2093, 95
    %v2105 = vpop.permute.xlu0 %2104
    %2106 = vrot.lane.b32.xlu0 %v2095, 95
    %v2107 = vpop.permute.xlu0 %2106
    %2108 = vrot.lane.b32.xlu0 %v2097, 95
    %v2109 = vpop.permute.xlu0 %2108
    %v2110 = vsel %vm362, %v2107, %v2109
    %v2111 = vsel %vm362, %v2105, %v2107
    %v2112 = vsel %vm362, %v2103, %v2105
    %v2113 = vsel %vm362, %v2109, %v2103
    %v2114 = vadd.f32 %v2112, 0.0
    %v2115 = vadd.f32 %v2111, 0.0
    %v2116 = vadd.f32 %v2110, 0.0
    %v2117 = vadd.f32 %v2113, 0.0
    %v2118 = vrot.slane %v2074, 1
    %v2119 = vsel %vm342, %v2078, %v2118
    %v2120 = vrot.slane %v2075, 1
    %v2121 = vsel %vm342, %v2079, %v2120
    %v2122 = vrot.slane %v2076, 1
    %v2123 = vsel %vm342, %v2080, %v2122
    %v2124 = vrot.slane %v2077, 1
    %v2125 = vsel %vm342, %v2081, %v2124
    %2130 = vrot.lane.b32.xlu0 %v2119, 96
    %v2131 = vpop.permute.xlu0 %2130
    %2132 = vrot.lane.b32.xlu0 %v2121, 96
    %v2133 = vpop.permute.xlu0 %2132
    %2134 = vrot.lane.b32.xlu0 %v2123, 96
    %v2135 = vpop.permute.xlu0 %2134
    %2136 = vrot.lane.b32.xlu0 %v2125, 96
    %v2137 = vpop.permute.xlu0 %2136
    %v2138 = vsel %vm391, %v2135, %v2137
    %v2139 = vsel %vm391, %v2133, %v2135
    %v2140 = vsel %vm391, %v2131, %v2133
    %v2141 = vsel %vm391, %v2137, %v2131
    %v2142 = vadd.f32 %v2114, %v2140
    %v2143 = vadd.f32 %v2115, %v2139
    %v2144 = vadd.f32 %v2116, %v2138
    %v2145 = vadd.f32 %v2117, %v2141
    %v2146 = vrot.slane %v2074, 2
    %v2147 = vrot.slane %v2078, 1
    %v2148 = vsel %vm342, %v2147, %v2146
    %v2149 = vrot.slane %v2075, 2
    %v2150 = vrot.slane %v2079, 1
    %v2151 = vsel %vm342, %v2150, %v2149
    %v2152 = vrot.slane %v2076, 2
    %v2153 = vrot.slane %v2080, 1
    %v2154 = vsel %vm342, %v2153, %v2152
    %v2155 = vrot.slane %v2077, 2
    %v2156 = vrot.slane %v2081, 1
    %v2157 = vsel %vm342, %v2156, %v2155
    %2162 = vrot.lane.b32.xlu0 %v2148, 97
    %v2163 = vpop.permute.xlu0 %2162
    %2164 = vrot.lane.b32.xlu0 %v2151, 97
    %v2165 = vpop.permute.xlu0 %2164
    %2166 = vrot.lane.b32.xlu0 %v2154, 97
    %v2167 = vpop.permute.xlu0 %2166
    %2168 = vrot.lane.b32.xlu0 %v2157, 97
    %v2169 = vpop.permute.xlu0 %2168
    %v2170 = vsel %vm424, %v2167, %v2169
    %v2171 = vsel %vm424, %v2165, %v2167
    %v2172 = vsel %vm424, %v2163, %v2165
    %v2173 = vsel %vm424, %v2169, %v2163
    %v2174 = vadd.f32 %v2142, %v2172
    %v2175 = vadd.f32 %v2143, %v2171
    %v2176 = vadd.f32 %v2144, %v2170
    %v2177 = vadd.f32 %v2145, %v2173
    %v2178 = vrot.slane %v2074, 3
    %v2179 = vrot.slane %v2078, 2
    %v2180 = vsel %vm342, %v2179, %v2178
    %v2181 = vrot.slane %v2075, 3
    %v2182 = vrot.slane %v2079, 2
    %v2183 = vsel %vm342, %v2182, %v2181
    %v2184 = vrot.slane %v2076, 3
    %v2185 = vrot.slane %v2080, 2
    %v2186 = vsel %vm342, %v2185, %v2184
    %v2187 = vrot.slane %v2077, 3
    %v2188 = vrot.slane %v2081, 2
    %v2189 = vsel %vm342, %v2188, %v2187
    %2194 = vrot.lane.b32.xlu0 %v2180, 127
    %v2195 = vpop.permute.xlu0 %2194
    %2196 = vrot.lane.b32.xlu0 %v2183, 127
    %v2197 = vpop.permute.xlu0 %2196
    %2198 = vrot.lane.b32.xlu0 %v2186, 127
    %v2199 = vpop.permute.xlu0 %2198
    %2200 = vrot.lane.b32.xlu0 %v2189, 127
    %v2201 = vpop.permute.xlu0 %2200
    %v2202 = vsel %vm457, %v2199, %v2201
    %v2203 = vsel %vm457, %v2197, %v2199
    %v2204 = vsel %vm457, %v2195, %v2197
    %v2205 = vsel %vm457, %v2201, %v2195
    %v2206 = vadd.f32 %v2174, %v2204
    %v2207 = vadd.f32 %v2175, %v2203
    %v2208 = vadd.f32 %v2176, %v2202
    %v2209 = vadd.f32 %v2177, %v2205
    %v2210 = vrot.slane %v2074, 4
    %v2211 = vrot.slane %v2078, 3
    %v2212 = vsel %vm342, %v2211, %v2210
    %v2213 = vrot.slane %v2075, 4
    %v2214 = vrot.slane %v2079, 3
    %v2215 = vsel %vm342, %v2214, %v2213
    %v2216 = vrot.slane %v2076, 4
    %v2217 = vrot.slane %v2080, 3
    %v2218 = vsel %vm342, %v2217, %v2216
    %v2219 = vrot.slane %v2077, 4
    %v2220 = vrot.slane %v2081, 3
    %v2221 = vsel %vm342, %v2220, %v2219
    %2226 = vrot.lane.b32.xlu0 %v2212, 1
    %v2227 = vpop.permute.xlu0 %2226
    %2228 = vrot.lane.b32.xlu0 %v2215, 1
    %v2229 = vpop.permute.xlu0 %2228
    %2230 = vrot.lane.b32.xlu0 %v2218, 1
    %v2231 = vpop.permute.xlu0 %2230
    %2232 = vrot.lane.b32.xlu0 %v2221, 1
    %v2233 = vpop.permute.xlu0 %2232
    %v2234 = vsel %vm490, %v2231, %v2233
    %v2235 = vsel %vm490, %v2229, %v2231
    %v2236 = vsel %vm490, %v2227, %v2229
    %v2237 = vsel %vm490, %v2233, %v2227
    %v2238 = vadd.f32 %v2206, %v2237
    %v2239 = vadd.f32 %v2207, %v2236
    %v2240 = vadd.f32 %v2208, %v2235
    %v2241 = vadd.f32 %v2209, %v2234
    %v2242 = vrot.slane %v2074, 5
    %v2243 = vrot.slane %v2078, 4
    %v2244 = vsel %vm342, %v2243, %v2242
    %v2245 = vrot.slane %v2075, 5
    %v2246 = vrot.slane %v2079, 4
    %v2247 = vsel %vm342, %v2246, %v2245
    %v2248 = vrot.slane %v2076, 5
    %v2249 = vrot.slane %v2080, 4
    %v2250 = vsel %vm342, %v2249, %v2248
    %v2251 = vrot.slane %v2077, 5
    %v2252 = vrot.slane %v2081, 4
    %v2253 = vsel %vm342, %v2252, %v2251
    %2258 = vrot.lane.b32.xlu0 %v2244, 31
    %v2259 = vpop.permute.xlu0 %2258
    %2260 = vrot.lane.b32.xlu0 %v2247, 31
    %v2261 = vpop.permute.xlu0 %2260
    %2262 = vrot.lane.b32.xlu0 %v2250, 31
    %v2263 = vpop.permute.xlu0 %2262
    %2264 = vrot.lane.b32.xlu0 %v2253, 31
    %v2265 = vpop.permute.xlu0 %2264
    %v2266 = vsel %vm523, %v2263, %v2265
    %v2267 = vsel %vm523, %v2261, %v2263
    %v2268 = vsel %vm523, %v2259, %v2261
    %v2269 = vsel %vm523, %v2265, %v2259
    %v2270 = vadd.f32 %v2238, %v2269
    %v2271 = vadd.f32 %v2239, %v2268
    %v2272 = vadd.f32 %v2240, %v2267
    %v2273 = vadd.f32 %v2241, %v2266
    %v2274 = vrot.slane %v2074, 6
    %v2275 = vrot.slane %v2078, 5
    %v2276 = vsel %vm342, %v2275, %v2274
    %v2277 = vrot.slane %v2075, 6
    %v2278 = vrot.slane %v2079, 5
    %v2279 = vsel %vm342, %v2278, %v2277
    %v2280 = vrot.slane %v2076, 6
    %v2281 = vrot.slane %v2080, 5
    %v2282 = vsel %vm342, %v2281, %v2280
    %v2283 = vrot.slane %v2077, 6
    %v2284 = vrot.slane %v2081, 5
    %v2285 = vsel %vm342, %v2284, %v2283
    %2290 = vrot.lane.b32.xlu0 %v2276, 32
    %v2291 = vpop.permute.xlu0 %2290
    %2292 = vrot.lane.b32.xlu0 %v2279, 32
    %v2293 = vpop.permute.xlu0 %2292
    %2294 = vrot.lane.b32.xlu0 %v2282, 32
    %v2295 = vpop.permute.xlu0 %2294
    %2296 = vrot.lane.b32.xlu0 %v2285, 32
    %v2297 = vpop.permute.xlu0 %2296
    %v2298 = vsel %vm556, %v2295, %v2297
    %v2299 = vsel %vm556, %v2293, %v2295
    %v2300 = vsel %vm556, %v2291, %v2293
    %v2301 = vsel %vm556, %v2297, %v2291
    %v2302 = vadd.f32 %v2270, %v2301
    %v2303 = vadd.f32 %v2271, %v2300
    %v2304 = vadd.f32 %v2272, %v2299
    %v2305 = vadd.f32 %v2273, %v2298
    %v2306 = vrot.slane %v2074, 7
    %v2307 = vrot.slane %v2078, 6
    %v2308 = vsel %vm342, %v2307, %v2306
    %v2309 = vrot.slane %v2075, 7
    %v2310 = vrot.slane %v2079, 6
    %v2311 = vsel %vm342, %v2310, %v2309
    %v2312 = vrot.slane %v2076, 7
    %v2313 = vrot.slane %v2080, 6
    %v2314 = vsel %vm342, %v2313, %v2312
    %v2315 = vrot.slane %v2077, 7
    %v2316 = vrot.slane %v2081, 6
    %v2317 = vsel %vm342, %v2316, %v2315
    %2322 = vrot.lane.b32.xlu0 %v2308, 33
    %v2323 = vpop.permute.xlu0 %2322
    %2324 = vrot.lane.b32.xlu0 %v2311, 33
    %v2325 = vpop.permute.xlu0 %2324
    %2326 = vrot.lane.b32.xlu0 %v2314, 33
    %v2327 = vpop.permute.xlu0 %2326
    %2328 = vrot.lane.b32.xlu0 %v2317, 33
    %v2329 = vpop.permute.xlu0 %2328
    %v2330 = vsel %vm589, %v2327, %v2329
    %v2331 = vsel %vm589, %v2325, %v2327
    %v2332 = vsel %vm589, %v2323, %v2325
    %v2333 = vsel %vm589, %v2329, %v2323
    %v2334 = vadd.f32 %v2302, %v2333
    %v2335 = vadd.f32 %v2303, %v2332
    %v2336 = vadd.f32 %v2304, %v2331
    %v2337 = vadd.f32 %v2305, %v2330
    %v2338 = vmul.f32 %v2334, %v237
    %v2339 = vmul.f32 %v2335, %v238
    %v2340 = vmul.f32 %v2336, %v239
    %v2341 = vmul.f32 %v2337, %v240
    %v2342 = vadd.f32 %v1994, %v2338
    %v2343 = vadd.f32 %v1995, %v2339
    %v2344 = vadd.f32 %v1996, %v2340
    %v2345 = vadd.f32 %v1997, %v2341
    %v2350 = vcombine.low %v2338, %v2339
    %v2351 = vcombine.low %v2340, %v2341
    %v2353 = vunpack.c.l.s4 1966171168
    %v2354 = vunpack.c.0.s8 %v2353
    %v2355 = vlaneseq
    %v2356 = vshrl.u32 %v2355, 7
    %v2357 = vsub.s32 %v2354, %v2356
    %v2358 = vrot.slane %v2350, %v2357
    %v2360 = vunpack.c.l.s4 1966171168
    %v2361 = vunpack.c.0.s8 %v2360
    %v2362 = vlaneseq
    %v2363 = vshrl.u32 %v2362, 7
    %v2364 = vsub.s32 %v2361, %v2363
    %v2365 = vrot.slane %v2351, %v2364
    %v2366 = vcombine.low %v2358, %v2365
    %v2367 = vcombine.high %v2358, %v2365
    %v2369 = vunpack.c.l.s4 1966171168
    %v2370 = vunpack.c.0.s8 %v2369
    %v2371 = vlaneseq
    %v2372 = vshrl.u32 %v2371, 7
    %v2373 = vsub.s32 %v2370, %v2372
    %v2374 = vrot.slane %v2366, %v2373
    %v2376 = vunpack.c.l.s4 1966171168
    %v2377 = vunpack.c.0.s8 %v2376
    %v2378 = vlaneseq
    %v2379 = vshrl.u32 %v2378, 7
    %v2380 = vsub.s32 %v2377, %v2379
    %v2381 = vrot.slane %v2367, %v2380
    %v2382 = vlaneseq
    %v2383 = vshrl.u32 %v2382, 7
    %v2384 = vsub.s32 0, %v2383
    %v2385 = vrot.slane %v2374, %v2384
    %v2386 = vlaneseq
    %v2387 = vshrl.u32 %v2386, 7
    %v2388 = vsub.s32 1, %v2387
    %v2389 = vrot.slane %v2374, %v2388
    %v2390 = vlaneseq
    %v2391 = vshrl.u32 %v2390, 7
    %v2392 = vsub.s32 2, %v2391
    %v2393 = vrot.slane %v2374, %v2392
    %v2394 = vlaneseq
    %v2395 = vshrl.u32 %v2394, 7
    %v2396 = vsub.s32 3, %v2395
    %v2397 = vrot.slane %v2374, %v2396
    %v2398 = vlaneseq
    %v2399 = vshrl.u32 %v2398, 7
    %v2400 = vsub.s32 0, %v2399
    %v2401 = vrot.slane %v2381, %v2400
    %v2402 = vlaneseq
    %v2403 = vshrl.u32 %v2402, 7
    %v2404 = vsub.s32 1, %v2403
    %v2405 = vrot.slane %v2381, %v2404
    %v2406 = vlaneseq
    %v2407 = vshrl.u32 %v2406, 7
    %v2408 = vsub.s32 2, %v2407
    %v2409 = vrot.slane %v2381, %v2408
    %v2410 = vlaneseq
    %v2411 = vshrl.u32 %v2410, 7
    %v2412 = vsub.s32 3, %v2411
    %v2413 = vrot.slane %v2381, %v2412
    %v2422 = vmul.f32 %v192, %v2385
    %v2423 = vmul.f32 %v193, %v2389
    %v2424 = vmul.f32 %v194, %v2393
    %v2425 = vmul.f32 %v195, %v2397
    %v2426 = vmul.f32 %v196, %v2401
    %v2427 = vmul.f32 %v197, %v2405
    %v2428 = vmul.f32 %v198, %v2409
    %v2429 = vmul.f32 %v199, %v2413
    %v2438 = vrot.slane %v2426, 7
    %v2439 = vsel %vm342, %v2438, %v2422
    %v2440 = vrot.slane %v2427, 7
    %v2441 = vsel %vm342, %v2440, %v2423
    %v2442 = vrot.slane %v2428, 7
    %v2443 = vsel %vm342, %v2442, %v2424
    %v2444 = vrot.slane %v2429, 7
    %v2445 = vsel %vm342, %v2444, %v2425
    %2450 = vrot.lane.b32.xlu0 %v2439, 95
    %v2451 = vpop.permute.xlu0 %2450
    %2452 = vrot.lane.b32.xlu0 %v2441, 95
    %v2453 = vpop.permute.xlu0 %2452
    %2454 = vrot.lane.b32.xlu0 %v2443, 95
    %v2455 = vpop.permute.xlu0 %2454
    %2456 = vrot.lane.b32.xlu0 %v2445, 95
    %v2457 = vpop.permute.xlu0 %2456
    %v2458 = vsel %vm362, %v2455, %v2457
    %v2459 = vsel %vm362, %v2453, %v2455
    %v2460 = vsel %vm362, %v2451, %v2453
    %v2461 = vsel %vm362, %v2457, %v2451
    %v2462 = vadd.f32 %v2460, 0.0
    %v2463 = vadd.f32 %v2459, 0.0
    %v2464 = vadd.f32 %v2458, 0.0
    %v2465 = vadd.f32 %v2461, 0.0
    %v2466 = vrot.slane %v2422, 1
    %v2467 = vsel %vm342, %v2426, %v2466
    %v2468 = vrot.slane %v2423, 1
    %v2469 = vsel %vm342, %v2427, %v2468
    %v2470 = vrot.slane %v2424, 1
    %v2471 = vsel %vm342, %v2428, %v2470
    %v2472 = vrot.slane %v2425, 1
    %v2473 = vsel %vm342, %v2429, %v2472
    %2478 = vrot.lane.b32.xlu0 %v2467, 96
    %v2479 = vpop.permute.xlu0 %2478
    %2480 = vrot.lane.b32.xlu0 %v2469, 96
    %v2481 = vpop.permute.xlu0 %2480
    %2482 = vrot.lane.b32.xlu0 %v2471, 96
    %v2483 = vpop.permute.xlu0 %2482
    %2484 = vrot.lane.b32.xlu0 %v2473, 96
    %v2485 = vpop.permute.xlu0 %2484
    %v2486 = vsel %vm391, %v2483, %v2485
    %v2487 = vsel %vm391, %v2481, %v2483
    %v2488 = vsel %vm391, %v2479, %v2481
    %v2489 = vsel %vm391, %v2485, %v2479
    %v2490 = vadd.f32 %v2462, %v2488
    %v2491 = vadd.f32 %v2463, %v2487
    %v2492 = vadd.f32 %v2464, %v2486
    %v2493 = vadd.f32 %v2465, %v2489
    %v2494 = vrot.slane %v2422, 2
    %v2495 = vrot.slane %v2426, 1
    %v2496 = vsel %vm342, %v2495, %v2494
    %v2497 = vrot.slane %v2423, 2
    %v2498 = vrot.slane %v2427, 1
    %v2499 = vsel %vm342, %v2498, %v2497
    %v2500 = vrot.slane %v2424, 2
    %v2501 = vrot.slane %v2428, 1
    %v2502 = vsel %vm342, %v2501, %v2500
    %v2503 = vrot.slane %v2425, 2
    %v2504 = vrot.slane %v2429, 1
    %v2505 = vsel %vm342, %v2504, %v2503
    %2510 = vrot.lane.b32.xlu0 %v2496, 97
    %v2511 = vpop.permute.xlu0 %2510
    %2512 = vrot.lane.b32.xlu0 %v2499, 97
    %v2513 = vpop.permute.xlu0 %2512
    %2514 = vrot.lane.b32.xlu0 %v2502, 97
    %v2515 = vpop.permute.xlu0 %2514
    %2516 = vrot.lane.b32.xlu0 %v2505, 97
    %v2517 = vpop.permute.xlu0 %2516
    %v2518 = vsel %vm424, %v2515, %v2517
    %v2519 = vsel %vm424, %v2513, %v2515
    %v2520 = vsel %vm424, %v2511, %v2513
    %v2521 = vsel %vm424, %v2517, %v2511
    %v2522 = vadd.f32 %v2490, %v2520
    %v2523 = vadd.f32 %v2491, %v2519
    %v2524 = vadd.f32 %v2492, %v2518
    %v2525 = vadd.f32 %v2493, %v2521
    %v2526 = vrot.slane %v2422, 3
    %v2527 = vrot.slane %v2426, 2
    %v2528 = vsel %vm342, %v2527, %v2526
    %v2529 = vrot.slane %v2423, 3
    %v2530 = vrot.slane %v2427, 2
    %v2531 = vsel %vm342, %v2530, %v2529
    %v2532 = vrot.slane %v2424, 3
    %v2533 = vrot.slane %v2428, 2
    %v2534 = vsel %vm342, %v2533, %v2532
    %v2535 = vrot.slane %v2425, 3
    %v2536 = vrot.slane %v2429, 2
    %v2537 = vsel %vm342, %v2536, %v2535
    %2542 = vrot.lane.b32.xlu0 %v2528, 127
    %v2543 = vpop.permute.xlu0 %2542
    %2544 = vrot.lane.b32.xlu0 %v2531, 127
    %v2545 = vpop.permute.xlu0 %2544
    %2546 = vrot.lane.b32.xlu0 %v2534, 127
    %v2547 = vpop.permute.xlu0 %2546
    %2548 = vrot.lane.b32.xlu0 %v2537, 127
    %v2549 = vpop.permute.xlu0 %2548
    %v2550 = vsel %vm457, %v2547, %v2549
    %v2551 = vsel %vm457, %v2545, %v2547
    %v2552 = vsel %vm457, %v2543, %v2545
    %v2553 = vsel %vm457, %v2549, %v2543
    %v2554 = vadd.f32 %v2522, %v2552
    %v2555 = vadd.f32 %v2523, %v2551
    %v2556 = vadd.f32 %v2524, %v2550
    %v2557 = vadd.f32 %v2525, %v2553
    %v2558 = vrot.slane %v2422, 4
    %v2559 = vrot.slane %v2426, 3
    %v2560 = vsel %vm342, %v2559, %v2558
    %v2561 = vrot.slane %v2423, 4
    %v2562 = vrot.slane %v2427, 3
    %v2563 = vsel %vm342, %v2562, %v2561
    %v2564 = vrot.slane %v2424, 4
    %v2565 = vrot.slane %v2428, 3
    %v2566 = vsel %vm342, %v2565, %v2564
    %v2567 = vrot.slane %v2425, 4
    %v2568 = vrot.slane %v2429, 3
    %v2569 = vsel %vm342, %v2568, %v2567
    %2574 = vrot.lane.b32.xlu0 %v2560, 1
    %v2575 = vpop.permute.xlu0 %2574
    %2576 = vrot.lane.b32.xlu0 %v2563, 1
    %v2577 = vpop.permute.xlu0 %2576
    %2578 = vrot.lane.b32.xlu0 %v2566, 1
    %v2579 = vpop.permute.xlu0 %2578
    %2580 = vrot.lane.b32.xlu0 %v2569, 1
    %v2581 = vpop.permute.xlu0 %2580
    %v2582 = vsel %vm490, %v2579, %v2581
    %v2583 = vsel %vm490, %v2577, %v2579
    %v2584 = vsel %vm490, %v2575, %v2577
    %v2585 = vsel %vm490, %v2581, %v2575
    %v2586 = vadd.f32 %v2554, %v2585
    %v2587 = vadd.f32 %v2555, %v2584
    %v2588 = vadd.f32 %v2556, %v2583
    %v2589 = vadd.f32 %v2557, %v2582
    %v2590 = vrot.slane %v2422, 5
    %v2591 = vrot.slane %v2426, 4
    %v2592 = vsel %vm342, %v2591, %v2590
    %v2593 = vrot.slane %v2423, 5
    %v2594 = vrot.slane %v2427, 4
    %v2595 = vsel %vm342, %v2594, %v2593
    %v2596 = vrot.slane %v2424, 5
    %v2597 = vrot.slane %v2428, 4
    %v2598 = vsel %vm342, %v2597, %v2596
    %v2599 = vrot.slane %v2425, 5
    %v2600 = vrot.slane %v2429, 4
    %v2601 = vsel %vm342, %v2600, %v2599
    %2606 = vrot.lane.b32.xlu0 %v2592, 31
    %v2607 = vpop.permute.xlu0 %2606
    %2608 = vrot.lane.b32.xlu0 %v2595, 31
    %v2609 = vpop.permute.xlu0 %2608
    %2610 = vrot.lane.b32.xlu0 %v2598, 31
    %v2611 = vpop.permute.xlu0 %2610
    %2612 = vrot.lane.b32.xlu0 %v2601, 31
    %v2613 = vpop.permute.xlu0 %2612
    %v2614 = vsel %vm523, %v2611, %v2613
    %v2615 = vsel %vm523, %v2609, %v2611
    %v2616 = vsel %vm523, %v2607, %v2609
    %v2617 = vsel %vm523, %v2613, %v2607
    %v2618 = vadd.f32 %v2586, %v2617
    %v2619 = vadd.f32 %v2587, %v2616
    %v2620 = vadd.f32 %v2588, %v2615
    %v2621 = vadd.f32 %v2589, %v2614
    %v2622 = vrot.slane %v2422, 6
    %v2623 = vrot.slane %v2426, 5
    %v2624 = vsel %vm342, %v2623, %v2622
    %v2625 = vrot.slane %v2423, 6
    %v2626 = vrot.slane %v2427, 5
    %v2627 = vsel %vm342, %v2626, %v2625
    %v2628 = vrot.slane %v2424, 6
    %v2629 = vrot.slane %v2428, 5
    %v2630 = vsel %vm342, %v2629, %v2628
    %v2631 = vrot.slane %v2425, 6
    %v2632 = vrot.slane %v2429, 5
    %v2633 = vsel %vm342, %v2632, %v2631
    %2638 = vrot.lane.b32.xlu0 %v2624, 32
    %v2639 = vpop.permute.xlu0 %2638
    %2640 = vrot.lane.b32.xlu0 %v2627, 32
    %v2641 = vpop.permute.xlu0 %2640
    %2642 = vrot.lane.b32.xlu0 %v2630, 32
    %v2643 = vpop.permute.xlu0 %2642
    %2644 = vrot.lane.b32.xlu0 %v2633, 32
    %v2645 = vpop.permute.xlu0 %2644
    %v2646 = vsel %vm556, %v2643, %v2645
    %v2647 = vsel %vm556, %v2641, %v2643
    %v2648 = vsel %vm556, %v2639, %v2641
    %v2649 = vsel %vm556, %v2645, %v2639
    %v2650 = vadd.f32 %v2618, %v2649
    %v2651 = vadd.f32 %v2619, %v2648
    %v2652 = vadd.f32 %v2620, %v2647
    %v2653 = vadd.f32 %v2621, %v2646
    %v2654 = vrot.slane %v2422, 7
    %v2655 = vrot.slane %v2426, 6
    %v2656 = vsel %vm342, %v2655, %v2654
    %v2657 = vrot.slane %v2423, 7
    %v2658 = vrot.slane %v2427, 6
    %v2659 = vsel %vm342, %v2658, %v2657
    %v2660 = vrot.slane %v2424, 7
    %v2661 = vrot.slane %v2428, 6
    %v2662 = vsel %vm342, %v2661, %v2660
    %v2663 = vrot.slane %v2425, 7
    %v2664 = vrot.slane %v2429, 6
    %v2665 = vsel %vm342, %v2664, %v2663
    %2670 = vrot.lane.b32.xlu0 %v2656, 33
    %v2671 = vpop.permute.xlu0 %2670
    %2672 = vrot.lane.b32.xlu0 %v2659, 33
    %v2673 = vpop.permute.xlu0 %2672
    %2674 = vrot.lane.b32.xlu0 %v2662, 33
    %v2675 = vpop.permute.xlu0 %2674
    %2676 = vrot.lane.b32.xlu0 %v2665, 33
    %v2677 = vpop.permute.xlu0 %2676
    %v2678 = vsel %vm589, %v2675, %v2677
    %v2679 = vsel %vm589, %v2673, %v2675
    %v2680 = vsel %vm589, %v2671, %v2673
    %v2681 = vsel %vm589, %v2677, %v2671
    %v2682 = vadd.f32 %v2650, %v2681
    %v2683 = vadd.f32 %v2651, %v2680
    %v2684 = vadd.f32 %v2652, %v2679
    %v2685 = vadd.f32 %v2653, %v2678
    %v2686 = vadd.f32 %v2342, %v2682
    %v2687 = vadd.f32 %v2343, %v2683
    %v2688 = vadd.f32 %v2344, %v2684
    %v2689 = vadd.f32 %v2345, %v2685
    %v2694 = vcombine.low %v2686, %v2687
    %v2695 = vcombine.low %v2688, %v2689
    %v2697 = vunpack.c.l.s4 1983009808
    %v2698 = vunpack.c.0.s8 %v2697
    %v2699 = vlaneseq
    %v2700 = vshrl.u32 %v2699, 7
    %v2701 = vsub.s32 %v2698, %v2700
    %v2702 = vrot.slane %v2694, %v2701
    %v2704 = vunpack.c.l.s4 1983009808
    %v2705 = vunpack.c.0.s8 %v2704
    %v2706 = vlaneseq
    %v2707 = vshrl.u32 %v2706, 7
    %v2708 = vsub.s32 %v2705, %v2707
    %v2709 = vrot.slane %v2695, %v2708
    %v2710 = vcombine.low %v2702, %v2709
    %2712 = vst [vmem:[#allocation7] sm:$0xff] %v2710
    // Predicated region
    $region26: #{tpu_custom_call.1} parent=1 // pred_check
      _
    $region27: #{tpu_custom_call.1} parent=1 // pred_check_branch
      %2714 = sbr.rel (0) target = $region29
    $region28: #{tpu_custom_call.1} parent=1 // pred_region
      %s2716 = ssub.s32 128, 128
      %2717 = vsyncadd [#allocation4], %s2716
      %s2719 = sshll.u32 [#allocation7], 4
      %s2720 = int_to_ptr.vmem [resolvable:$true] %s2719
      %2722 = dma.vmem_to_hbm [thread:$0]  %s2720, 128, %s4, [#allocation4]
    $region29: #{tpu_custom_call.1} parent=1 // pred_fallthru
      _
    // Predicated region
    $region30: #{tpu_custom_call.1} parent=1 // pred_check
      _
    $region31: #{tpu_custom_call.1} parent=1 // pred_check_branch
      %2724 = sbr.rel (0) target = $region33
    $region32: #{tpu_custom_call.1} parent=1 // pred_region
      %2725 = dma.done [#allocation4], 128
    $region33: #{tpu_custom_call.1} parent=1 // pred_fallthru
      _
    %2726 = vsyncpa [#allocation3], 1
    %2727 = vsyncpa [#allocation6], 1
    %2728 = vsyncpa [#allocation4], 1

</llo_original>
